<compile_context>
chip_gen: v5e
topology: v5e:2x2
jax: 0.10.0
libtpu: 0.0.40
codegen_flags: <defaults>
</compile_context>

<pallas_src>
import jax
import jax.numpy as jnp
from jax.experimental import pallas as pl
from jax.experimental.pallas import tpu as pltpu


TILE_B = 128   # batch tile (multiple of 128: fills v5e MXU rows; v6e/v7x fine too)
LANE = 128     # lane-dense padding target for the class dimension


def mlp_kernel(x_ref, w1_ref, b1_ref, w2_ref, b2_ref, w3_ref, b3_ref, o_ref):
    # layer 1: Linear(inputDims -> 128) + sigmoid  (bf16 MXU inputs, f32 accumulate)
    h1 = jnp.dot(x_ref[...], w1_ref[...], preferred_element_type=jnp.float32)
    h1 = jax.nn.sigmoid(h1 + b1_ref[...])
    # layer 2: Linear(128 -> 256) + sigmoid
    h2 = jnp.dot(h1.astype(w2_ref.dtype), w2_ref[...],
                 preferred_element_type=jnp.float32)
    h2 = jax.nn.sigmoid(h2 + b2_ref[...])
    # layer 3: Linear(256 -> nClasses_padded), no activation (logits)
    out = jnp.dot(h2.astype(w3_ref.dtype), w3_ref[...],
                  preferred_element_type=jnp.float32)
    o_ref[...] = (out + b3_ref[...]).astype(o_ref.dtype)


def _pad_axis(a, multiple, axis):
    pad = (-a.shape[axis]) % multiple
    if pad == 0:
        return a
    widths = [(0, 0)] * a.ndim
    widths[axis] = (0, pad)
    return jnp.pad(a, widths)


@jax.jit
def linear_classifier_forward(x, w1, b1, w2, b2, w3, b3):
    batch, in_dim = x.shape
    h1_dim = w1.shape[1]
    h2_dim = w2.shape[1]
    n_classes = w3.shape[1]

    mxu_dtype = jnp.bfloat16  # MXU input dtype; accumulation stays f32

    # Pad batch to the tile size and the class dim to a lane-dense 128 width.
    x_p = _pad_axis(x, TILE_B, 0).astype(mxu_dtype)
    w1_c = w1.astype(mxu_dtype)
    w2_c = w2.astype(mxu_dtype)
    w3_p = _pad_axis(w3, LANE, 1).astype(mxu_dtype)
    b3_p = _pad_axis(b3, LANE, 1)

    padded_batch = x_p.shape[0]
    c_pad = w3_p.shape[1]
    grid = (padded_batch // TILE_B,)

    const2 = lambda i: (0, 0)  # weights/biases: same block every step -> VMEM resident

    out = pl.pallas_call(
        mlp_kernel,
        out_shape=jax.ShapeDtypeStruct((padded_batch, c_pad), jnp.float32),
        grid_spec=pltpu.PrefetchScalarGridSpec(
            num_scalar_prefetch=0,
            grid=grid,
            in_specs=[
                pl.BlockSpec((TILE_B, in_dim), lambda i: (i, 0)),  # x: tiled over batch
                pl.BlockSpec((in_dim, h1_dim), const2),            # W1
                pl.BlockSpec((1, h1_dim), const2),                 # b1
                pl.BlockSpec((h1_dim, h2_dim), const2),            # W2
                pl.BlockSpec((1, h2_dim), const2),                 # b2
                pl.BlockSpec((h2_dim, c_pad), const2),             # W3 (lane-padded)
                pl.BlockSpec((1, c_pad), const2),                  # b3 (lane-padded)
            ],
            out_specs=pl.BlockSpec((TILE_B, c_pad), lambda i: (i, 0)),
        ),
        compiler_params=pltpu.CompilerParams(
            # Batch tiles are independent -> shard across TCs on v7x.
            dimension_semantics=("parallel",),
        ),
    )(x_p, w1_c, b1, w2_c, b2, w3_p, b3_p)

    # Strip batch padding and the lane padding of the class dimension.
    return out[:batch, :n_classes]


def init_linear_params(key, fan_in, fan_out):
    """Deterministic init mimicking PyTorch nn.Linear default (uniform +-1/sqrt(fan_in))."""
    k_w, k_b = jax.random.split(key)
    bound = 1.0 / (fan_in ** 0.5)
    # stored as (in, out) so the kernel does x @ W
    w = jax.random.uniform(k_w, (fan_in, fan_out), jnp.float32, -bound, bound)
    b = jax.random.uniform(k_b, (1, fan_out), jnp.float32, -bound, bound)
    return w, b


if __name__ == "__main__":
    # inputDims=(32,), nClasses=10. batch=200 (non-multiple of the 128-row tile,
    # exercises the batch-padding path; padded to 256 -> 2 grid steps).
    batch, input_dims, n_classes = 200, 32, 10

    key = jax.random.PRNGKey(0)
    k_x, k1, k2, k3 = jax.random.split(key, 4)

    x = jax.random.normal(k_x, (batch, input_dims), jnp.float32)
    w1, b1 = init_linear_params(k1, input_dims, 128)
    w2, b2 = init_linear_params(k2, 128, 256)
    w3, b3 = init_linear_params(k3, 256, n_classes)

    out = linear_classifier_forward(x, w1, b1, w2, b2, w3, b3)
    out = jax.block_until_ready(out)
    assert out.shape == (batch, n_classes)

    # Reference 1: same math path in plain JAX (bf16 MXU inputs, f32 accumulate).
    bf16 = jnp.bfloat16
    r1 = jax.nn.sigmoid(
        jnp.dot(x.astype(bf16), w1.astype(bf16), preferred_element_type=jnp.float32) + b1)
    r2 = jax.nn.sigmoid(
        jnp.dot(r1.astype(bf16), w2.astype(bf16), preferred_element_type=jnp.float32) + b2)
    ref_bf16 = jnp.dot(r2.astype(bf16), w3.astype(bf16),
                       preferred_element_type=jnp.float32) + b3
    assert jnp.allclose(out, ref_bf16, atol=1e-4, rtol=1e-4)

    # Reference 2: pure-f32 forward matching the PyTorch module (loose tolerance
    # because the kernel feeds bf16 to the MXU).
    ref_f32 = jax.nn.sigmoid(x @ w1 + b1)
    ref_f32 = jax.nn.sigmoid(ref_f32 @ w2 + b2)
    ref_f32 = ref_f32 @ w3 + b3
    assert jnp.allclose(out, ref_f32, atol=5e-2, rtol=5e-2)

    # TODO(synk): training-side pieces (Adam optimizer, CrossEntropyLoss, updateModel)
    # are host/autograd logic, not part of the forward kernel.
    print("KERNEL_OK")
</pallas_src>

<mosaic_0001>
module attributes {stable_mosaic.version = 11 : i64} {
  func.func @mlp_kernel(%arg0: i32, %arg1: memref<128x32xbf16, #tpu.memory_space<vmem>>, %arg2: memref<32x128xbf16, #tpu.memory_space<vmem>>, %arg3: memref<1x128xf32, #tpu.memory_space<vmem>>, %arg4: memref<128x256xbf16, #tpu.memory_space<vmem>>, %arg5: memref<1x256xf32, #tpu.memory_space<vmem>>, %arg6: memref<256x128xbf16, #tpu.memory_space<vmem>>, %arg7: memref<1x128xf32, #tpu.memory_space<vmem>>, %arg8: memref<128x128xf32, #tpu.memory_space<vmem>>) attributes {dimension_semantics = [#tpu.dimension_semantics<parallel>], iteration_bounds = array<i64: 2>, scalar_prefetch = 0 : i64, scratch_operands = 0 : i64, tpu.core_type = #tpu.core_type<tc>, window_params = [{transform_indices = @transform_0, window_bounds = array<i64: 128, 32>}, {pipeline_mode = #tpu.pipeline_mode<synchronous>, transform_indices = @transform_1, window_bounds = array<i64: 32, 128>}, {pipeline_mode = #tpu.pipeline_mode<synchronous>, transform_indices = @transform_2, window_bounds = array<i64: 1, 128>}, {pipeline_mode = #tpu.pipeline_mode<synchronous>, transform_indices = @transform_3, window_bounds = array<i64: 128, 256>}, {pipeline_mode = #tpu.pipeline_mode<synchronous>, transform_indices = @transform_4, window_bounds = array<i64: 1, 256>}, {pipeline_mode = #tpu.pipeline_mode<synchronous>, transform_indices = @transform_5, window_bounds = array<i64: 256, 128>}, {pipeline_mode = #tpu.pipeline_mode<synchronous>, transform_indices = @transform_6, window_bounds = array<i64: 1, 128>}, {transform_indices = @transform_7, window_bounds = array<i64: 128, 128>}]} {
    %c0 = arith.constant 0 : index
    %c0_0 = arith.constant 0 : index
    %0 = vector.load %arg1[%c0, %c0_0] : memref<128x32xbf16, #tpu.memory_space<vmem>>, vector<128x32xbf16>
    %c0_1 = arith.constant 0 : index
    %c0_2 = arith.constant 0 : index
    %1 = vector.load %arg2[%c0_1, %c0_2] : memref<32x128xbf16, #tpu.memory_space<vmem>>, vector<32x128xbf16>
    %cst = arith.constant dense<0.000000e+00> : vector<128x128xf32>
    %2 = tpu.matmul %0, %1, %cst {dimension_numbers = #tpu.dot_dimension_numbers<[1], [0], [0], [1], [0, 0, 1, 1], [], []>} : vector<128x32xbf16>, vector<32x128xbf16>, vector<128x128xf32> -> vector<128x128xf32>
    %c0_3 = arith.constant 0 : index
    %c0_4 = arith.constant 0 : index
    %3 = vector.load %arg3[%c0_3, %c0_4] : memref<1x128xf32, #tpu.memory_space<vmem>>, vector<1x128xf32>
    %4 = vector.broadcast %3 : vector<1x128xf32> to vector<128x128xf32>
    %5 = arith.addf %2, %4 : vector<128x128xf32>
    %6 = arith.negf %5 : vector<128x128xf32>
    %7 = math.exp %6 : vector<128x128xf32>
    %cst_5 = arith.constant 1.000000e+00 : f32
    %8 = vector.broadcast %cst_5 : f32 to vector<128x128xf32>
    %9 = arith.addf %8, %7 : vector<128x128xf32>
    %10 = arith.divf %8, %9 : vector<128x128xf32>
    %11 = arith.truncf %10 : vector<128x128xf32> to vector<128x128xbf16>
    %c0_6 = arith.constant 0 : index
    %c0_7 = arith.constant 0 : index
    %12 = vector.load %arg4[%c0_6, %c0_7] : memref<128x256xbf16, #tpu.memory_space<vmem>>, vector<128x256xbf16>
    %cst_8 = arith.constant dense<0.000000e+00> : vector<128x256xf32>
    %13 = tpu.matmul %11, %12, %cst_8 {dimension_numbers = #tpu.dot_dimension_numbers<[1], [0], [0], [1], [0, 0, 1, 1], [], []>} : vector<128x128xbf16>, vector<128x256xbf16>, vector<128x256xf32> -> vector<128x256xf32>
    %c0_9 = arith.constant 0 : index
    %c0_10 = arith.constant 0 : index
    %14 = vector.load %arg5[%c0_9, %c0_10] : memref<1x256xf32, #tpu.memory_space<vmem>>, vector<1x256xf32>
    %15 = vector.broadcast %14 : vector<1x256xf32> to vector<128x256xf32>
    %16 = arith.addf %13, %15 : vector<128x256xf32>
    %17 = arith.negf %16 : vector<128x256xf32>
    %18 = math.exp %17 : vector<128x256xf32>
    %cst_11 = arith.constant 1.000000e+00 : f32
    %19 = vector.broadcast %cst_11 : f32 to vector<128x256xf32>
    %20 = arith.addf %19, %18 : vector<128x256xf32>
    %21 = arith.divf %19, %20 : vector<128x256xf32>
    %22 = arith.truncf %21 : vector<128x256xf32> to vector<128x256xbf16>
    %c0_12 = arith.constant 0 : index
    %c0_13 = arith.constant 0 : index
    %23 = vector.load %arg6[%c0_12, %c0_13] : memref<256x128xbf16, #tpu.memory_space<vmem>>, vector<256x128xbf16>
    %cst_14 = arith.constant dense<0.000000e+00> : vector<128x128xf32>
    %24 = tpu.matmul %22, %23, %cst_14 {dimension_numbers = #tpu.dot_dimension_numbers<[1], [0], [0], [1], [0, 0, 1, 1], [], []>} : vector<128x256xbf16>, vector<256x128xbf16>, vector<128x128xf32> -> vector<128x128xf32>
    %c0_15 = arith.constant 0 : index
    %c0_16 = arith.constant 0 : index
    %25 = vector.load %arg7[%c0_15, %c0_16] : memref<1x128xf32, #tpu.memory_space<vmem>>, vector<1x128xf32>
    %26 = vector.broadcast %25 : vector<1x128xf32> to vector<128x128xf32>
    %27 = arith.addf %24, %26 : vector<128x128xf32>
    %c0_17 = arith.constant 0 : index
    %c0_18 = arith.constant 0 : index
    %28 = vector.load %arg8[%c0_17, %c0_18] : memref<128x128xf32, #tpu.memory_space<vmem>>, vector<128x128xf32>
    tpu.vector_store %arg8[%c0_17, %c0_18], %27 {strides = array<i32>} : memref<128x128xf32, #tpu.memory_space<vmem>>, vector<128x128xf32>,
    return
  }
  func.func @transform_0(%arg0: i32) -> (i32, i32) {
    %c0_i32 = arith.constant 0 : i32
    %c0_i32_0 = arith.constant 0 : i32
    return %arg0, %c0_i32 : i32, i32
  }
  func.func @transform_1(%arg0: i32) -> (i32, i32) {
    %c0_i32 = arith.constant 0 : i32
    %c0_i32_0 = arith.constant 0 : i32
    %c0_i32_1 = arith.constant 0 : i32
    return %c0_i32, %c0_i32_0 : i32, i32
  }
  func.func @transform_2(%arg0: i32) -> (i32, i32) {
    %c0_i32 = arith.constant 0 : i32
    %c0_i32_0 = arith.constant 0 : i32
    %c0_i32_1 = arith.constant 0 : i32
    return %c0_i32, %c0_i32_0 : i32, i32
  }
  func.func @transform_3(%arg0: i32) -> (i32, i32) {
    %c0_i32 = arith.constant 0 : i32
    %c0_i32_0 = arith.constant 0 : i32
    %c0_i32_1 = arith.constant 0 : i32
    return %c0_i32, %c0_i32_0 : i32, i32
  }
  func.func @transform_4(%arg0: i32) -> (i32, i32) {
    %c0_i32 = arith.constant 0 : i32
    %c0_i32_0 = arith.constant 0 : i32
    %c0_i32_1 = arith.constant 0 : i32
    return %c0_i32, %c0_i32_0 : i32, i32
  }
  func.func @transform_5(%arg0: i32) -> (i32, i32) {
    %c0_i32 = arith.constant 0 : i32
    %c0_i32_0 = arith.constant 0 : i32
    %c0_i32_1 = arith.constant 0 : i32
    return %c0_i32, %c0_i32_0 : i32, i32
  }
  func.func @transform_6(%arg0: i32) -> (i32, i32) {
    %c0_i32 = arith.constant 0 : i32
    %c0_i32_0 = arith.constant 0 : i32
    %c0_i32_1 = arith.constant 0 : i32
    return %c0_i32, %c0_i32_0 : i32, i32
  }
  func.func @transform_7(%arg0: i32) -> (i32, i32) {
    %c0_i32 = arith.constant 0 : i32
    %c0_i32_0 = arith.constant 0 : i32
    return %arg0, %c0_i32 : i32, i32
  }
}

</mosaic_0001>

<llo_original>
// kernel: linear_classifier_forward.1
$region0: #{linear_classifier_forward.1}
  #allocation0 [shape = 'u32[]', space=smem, size = 0x4, offset = 0x4, fixed_abs, tag = 'smem constant byte address 0x4 - core index']
  #allocation1 [shape = 'u32[72,128]{1,0:T(1,128)}', space=vmem, size = 0x9000, scoped, tag = 'internal scratch']
  %s0 = inlined_call_operand.vmem [shape: bf16[256,32], index: 0, kind: input, shape index: {}]
  %s1 = inlined_call_operand.vmem [shape: bf16[32,128], index: 1, kind: input, shape index: {}]
  %s2 = inlined_call_operand.vmem [shape: f32[1,128], index: 2, kind: input, shape index: {}]
  %s3 = inlined_call_operand.vmem [shape: bf16[128,256], index: 3, kind: input, shape index: {}]
  %s4 = inlined_call_operand.vmem [shape: f32[1,256], index: 4, kind: input, shape index: {}]
  %s5 = inlined_call_operand.vmem [shape: bf16[256,128], index: 5, kind: input, shape index: {}]
  %s6 = inlined_call_operand.vmem [shape: f32[1,128], index: 6, kind: input, shape index: {}]
  %s7 = inlined_call_operand.vmem [shape: f32[256,128], index: 7, kind: output, shape index: {}]
  %s8 = sld [smem:[#allocation0]]
  $region61: #{linear_classifier_forward.1} parent=0
    _
  %s10 = ssub.s32 1, %s8
  %s11 = scalar_select 0, %s10, %s8
  loop: start=0, step=1, limit=4
  $region2: #{linear_classifier_forward.1} parent=0 // loop_pre_header
    _
  $region3: #{linear_classifier_forward.1} parent=0 // loop_header
    %s13 = sphi 0, %s17
    %p14 = scmp.ge.s32.totalorder %s13, 4
    %s23 = sphi 0, %s25
    %s26 = sphi 0, %s23
    %s27 = sphi 0, %s26
    %s43 = sphi 0, %s27
    %s47 = sphi 0, %s47
    %s49 = sphi 0, %s47
    %s50 = sphi 0, %s49
    %s64 = sphi 0, %s50
    %s68 = sphi 0, %s68
    %s70 = sphi 0, %s68
    %s71 = sphi 0, %s70
    %s85 = sphi 0, %s71
    %s89 = sphi 0, %s89
    %s91 = sphi 0, %s89
    %s92 = sphi 0, %s91
    %s106 = sphi 0, %s92
    %s110 = sphi 0, %s110
    %s112 = sphi 0, %s110
    %s113 = sphi 0, %s112
    %s127 = sphi 0, %s113
    %s131 = sphi 0, %s131
    %s133 = sphi 0, %s131
    %s134 = sphi 0, %s133
    %s148 = sphi 0, %s134
    %s152 = sphi 0, %s152
    %s154 = sphi 0, %s152
    %s155 = sphi 0, %s154
    %s169 = sphi 0, %s155
    %s175 = sphi 0, %s177
    %s178 = sphi 0, %s175
    %s179 = sphi 0, %s178
    %s195 = sphi 0, %s179
  $region4: #{linear_classifier_forward.1} parent=0 // loop_header_branch
    %16 = sbr.rel (%p14) target = $region8
  $region5: #{linear_classifier_forward.1} parent=0 // loop_body
    %s18 = ssub.s32 %s13, 1
    %s19 = ssub.s32 %s13, 2
    %s20 = sadd.s32 %s13, 1
    %s21 = ssub.s32 %s13, %s20
    %p22 = scmp.eq.s32.totalorder %s21, 0
    %s24 = sadd.s32 %s23, 1
    %s25 = scalar_select %p22, %s23, %s24
    %p28 = pneg %p22
    %p29 = scmp.eq.s32.totalorder %s13, 1
    %p30 = por %p28, %p29
    %p31 = scmp.ne.s32.totalorder %s23, %s26
    %p32 = scmp.eq.s32.totalorder %s13, 0
    %p33 = por %p31, %p32
    %p34 = scmp.ne.s32.totalorder %s23, %s26
    %p35 = scmp.eq.s32.totalorder %s18, 1
    %p36 = por %p34, %p35
    %p37 = scmp.ne.s32.totalorder %s26, %s27
    %p38 = scmp.eq.s32.totalorder %s18, 0
    %p39 = por %p37, %p38
    %p40 = scmp.ne.s32.totalorder %s26, %s27
    %p41 = scmp.eq.s32.totalorder %s19, 1
    %p42 = por %p40, %p41
    %p44 = scmp.ne.s32.totalorder %s27, %s43
    %p45 = scmp.eq.s32.totalorder %s19, 0
    %p46 = por %p44, %p45
    %s48 = sadd.s32 %s47, 1
    %p51 = scmp.eq.s32.totalorder %s13, 1
    %p52 = scmp.ne.s32.totalorder %s47, %s49
    %p53 = scmp.eq.s32.totalorder %s13, 0
    %p54 = por %p52, %p53
    %p55 = scmp.ne.s32.totalorder %s47, %s49
    %p56 = scmp.eq.s32.totalorder %s18, 1
    %p57 = por %p55, %p56
    %p58 = scmp.ne.s32.totalorder %s49, %s50
    %p59 = scmp.eq.s32.totalorder %s18, 0
    %p60 = por %p58, %p59
    %p61 = scmp.ne.s32.totalorder %s49, %s50
    %p62 = scmp.eq.s32.totalorder %s19, 1
    %p63 = por %p61, %p62
    %p65 = scmp.ne.s32.totalorder %s50, %s64
    %p66 = scmp.eq.s32.totalorder %s19, 0
    %p67 = por %p65, %p66
    %s69 = sadd.s32 %s68, 1
    %p72 = scmp.eq.s32.totalorder %s13, 1
    %p73 = scmp.ne.s32.totalorder %s68, %s70
    %p74 = scmp.eq.s32.totalorder %s13, 0
    %p75 = por %p73, %p74
    %p76 = scmp.ne.s32.totalorder %s68, %s70
    %p77 = scmp.eq.s32.totalorder %s18, 1
    %p78 = por %p76, %p77
    %p79 = scmp.ne.s32.totalorder %s70, %s71
    %p80 = scmp.eq.s32.totalorder %s18, 0
    %p81 = por %p79, %p80
    %p82 = scmp.ne.s32.totalorder %s70, %s71
    %p83 = scmp.eq.s32.totalorder %s19, 1
    %p84 = por %p82, %p83
    %p86 = scmp.ne.s32.totalorder %s71, %s85
    %p87 = scmp.eq.s32.totalorder %s19, 0
    %p88 = por %p86, %p87
    %s90 = sadd.s32 %s89, 1
    %p93 = scmp.eq.s32.totalorder %s13, 1
    %p94 = scmp.ne.s32.totalorder %s89, %s91
    %p95 = scmp.eq.s32.totalorder %s13, 0
    %p96 = por %p94, %p95
    %p97 = scmp.ne.s32.totalorder %s89, %s91
    %p98 = scmp.eq.s32.totalorder %s18, 1
    %p99 = por %p97, %p98
    %p100 = scmp.ne.s32.totalorder %s91, %s92
    %p101 = scmp.eq.s32.totalorder %s18, 0
    %p102 = por %p100, %p101
    %p103 = scmp.ne.s32.totalorder %s91, %s92
    %p104 = scmp.eq.s32.totalorder %s19, 1
    %p105 = por %p103, %p104
    %p107 = scmp.ne.s32.totalorder %s92, %s106
    %p108 = scmp.eq.s32.totalorder %s19, 0
    %p109 = por %p107, %p108
    %s111 = sadd.s32 %s110, 1
    %p114 = scmp.eq.s32.totalorder %s13, 1
    %p115 = scmp.ne.s32.totalorder %s110, %s112
    %p116 = scmp.eq.s32.totalorder %s13, 0
    %p117 = por %p115, %p116
    %p118 = scmp.ne.s32.totalorder %s110, %s112
    %p119 = scmp.eq.s32.totalorder %s18, 1
    %p120 = por %p118, %p119
    %p121 = scmp.ne.s32.totalorder %s112, %s113
    %p122 = scmp.eq.s32.totalorder %s18, 0
    %p123 = por %p121, %p122
    %p124 = scmp.ne.s32.totalorder %s112, %s113
    %p125 = scmp.eq.s32.totalorder %s19, 1
    %p126 = por %p124, %p125
    %p128 = scmp.ne.s32.totalorder %s113, %s127
    %p129 = scmp.eq.s32.totalorder %s19, 0
    %p130 = por %p128, %p129
    %s132 = sadd.s32 %s131, 1
    %p135 = scmp.eq.s32.totalorder %s13, 1
    %p136 = scmp.ne.s32.totalorder %s131, %s133
    %p137 = scmp.eq.s32.totalorder %s13, 0
    %p138 = por %p136, %p137
    %p139 = scmp.ne.s32.totalorder %s131, %s133
    %p140 = scmp.eq.s32.totalorder %s18, 1
    %p141 = por %p139, %p140
    %p142 = scmp.ne.s32.totalorder %s133, %s134
    %p143 = scmp.eq.s32.totalorder %s18, 0
    %p144 = por %p142, %p143
    %p145 = scmp.ne.s32.totalorder %s133, %s134
    %p146 = scmp.eq.s32.totalorder %s19, 1
    %p147 = por %p145, %p146
    %p149 = scmp.ne.s32.totalorder %s134, %s148
    %p150 = scmp.eq.s32.totalorder %s19, 0
    %p151 = por %p149, %p150
    %s153 = sadd.s32 %s152, 1
    %p156 = scmp.eq.s32.totalorder %s13, 1
    %p157 = scmp.ne.s32.totalorder %s152, %s154
    %p158 = scmp.eq.s32.totalorder %s13, 0
    %p159 = por %p157, %p158
    %p160 = scmp.ne.s32.totalorder %s152, %s154
    %p161 = scmp.eq.s32.totalorder %s18, 1
    %p162 = por %p160, %p161
    %p163 = scmp.ne.s32.totalorder %s154, %s155
    %p164 = scmp.eq.s32.totalorder %s18, 0
    %p165 = por %p163, %p164
    %p166 = scmp.ne.s32.totalorder %s154, %s155
    %p167 = scmp.eq.s32.totalorder %s19, 1
    %p168 = por %p166, %p167
    %p170 = scmp.ne.s32.totalorder %s155, %s169
    %p171 = scmp.eq.s32.totalorder %s19, 0
    %p172 = por %p170, %p171
    %s173 = ssub.s32 %s13, %s20
    %p174 = scmp.eq.s32.totalorder %s173, 0
    %s176 = sadd.s32 %s175, 1
    %s177 = scalar_select %p174, %s175, %s176
    %p180 = pneg %p174
    %p181 = scmp.eq.s32.totalorder %s13, 1
    %p182 = por %p180, %p181
    %p183 = scmp.ne.s32.totalorder %s175, %s178
    %p184 = scmp.eq.s32.totalorder %s13, 0
    %p185 = por %p183, %p184
    %p186 = scmp.ne.s32.totalorder %s175, %s178
    %p187 = scmp.eq.s32.totalorder %s18, 1
    %p188 = por %p186, %p187
    %p189 = scmp.ne.s32.totalorder %s178, %s179
    %p190 = scmp.eq.s32.totalorder %s18, 0
    %p191 = por %p189, %p190
    %p192 = scmp.ne.s32.totalorder %s178, %s179
    %p193 = scmp.eq.s32.totalorder %s19, 1
    %p194 = por %p192, %p193
    %p196 = scmp.ne.s32.totalorder %s179, %s195
    %p197 = scmp.eq.s32.totalorder %s19, 0
    %p198 = por %p196, %p197
    %p199 = scmp.le.s32.totalorder 1, %s13
    %p200 = scmp.lt.s32.totalorder %s13, 3
    %p201 = pnand %p199, %p200
    %p202 = pneg %p201
    // Predicated region
    $region9: #{linear_classifier_forward.1} parent=5 // pred_check
      _
    $region10: #{linear_classifier_forward.1} parent=5 // pred_check_branch
      %204 = sbr.rel (%p201) target = $region12
    $region11: #{linear_classifier_forward.1} parent=5 // pred_region
      %s205 = ssub.s32 %s13, 1
      // Predicated region
      $region13: #{linear_classifier_forward.1} parent=11 // pred_check
        %p206 = pneg %p60
      $region14: #{linear_classifier_forward.1} parent=11 // pred_check_branch
        %208 = sbr.rel (%p206) target = $region16
      $region15: #{linear_classifier_forward.1} parent=11 // pred_region
        _
      $region16: #{linear_classifier_forward.1} parent=11 // pred_fallthru
        _
      // Predicated region
      $region17: #{linear_classifier_forward.1} parent=11 // pred_check
        %p209 = pneg %p81
      $region18: #{linear_classifier_forward.1} parent=11 // pred_check_branch
        %211 = sbr.rel (%p209) target = $region20
      $region19: #{linear_classifier_forward.1} parent=11 // pred_region
        _
      $region20: #{linear_classifier_forward.1} parent=11 // pred_fallthru
        _
      // Predicated region
      $region21: #{linear_classifier_forward.1} parent=11 // pred_check
        %p212 = pneg %p102
      $region22: #{linear_classifier_forward.1} parent=11 // pred_check_branch
        %214 = sbr.rel (%p212) target = $region24
      $region23: #{linear_classifier_forward.1} parent=11 // pred_region
        _
      $region24: #{linear_classifier_forward.1} parent=11 // pred_fallthru
        _
      // Predicated region
      $region25: #{linear_classifier_forward.1} parent=11 // pred_check
        %p215 = pneg %p123
      $region26: #{linear_classifier_forward.1} parent=11 // pred_check_branch
        %217 = sbr.rel (%p215) target = $region28
      $region27: #{linear_classifier_forward.1} parent=11 // pred_region
        _
      $region28: #{linear_classifier_forward.1} parent=11 // pred_fallthru
        _
      // Predicated region
      $region29: #{linear_classifier_forward.1} parent=11 // pred_check
        %p218 = pneg %p144
      $region30: #{linear_classifier_forward.1} parent=11 // pred_check_branch
        %220 = sbr.rel (%p218) target = $region32
      $region31: #{linear_classifier_forward.1} parent=11 // pred_region
        _
      $region32: #{linear_classifier_forward.1} parent=11 // pred_fallthru
        _
      // Predicated region
      $region33: #{linear_classifier_forward.1} parent=11 // pred_check
        %p221 = pneg %p165
      $region34: #{linear_classifier_forward.1} parent=11 // pred_check_branch
        %223 = sbr.rel (%p221) target = $region36
      $region35: #{linear_classifier_forward.1} parent=11 // pred_region
        _
      $region36: #{linear_classifier_forward.1} parent=11 // pred_fallthru
        _
    $region12: #{linear_classifier_forward.1} parent=5 // pred_fallthru
      _
    %p224 = scmp.lt.s32.totalorder %s13, 2
    // Predicated region
    $region37: #{linear_classifier_forward.1} parent=5 // pred_check
      %p225 = pneg %p224
    $region38: #{linear_classifier_forward.1} parent=5 // pred_check_branch
      %227 = sbr.rel (%p225) target = $region40
    $region39: #{linear_classifier_forward.1} parent=5 // pred_region
      // Predicated region
      $region41: #{linear_classifier_forward.1} parent=39 // pred_check
        %p228 = pneg %p33
      $region42: #{linear_classifier_forward.1} parent=39 // pred_check_branch
        %230 = sbr.rel (%p228) target = $region44
      $region43: #{linear_classifier_forward.1} parent=39 // pred_region
        %s231 = smul.u32 16, %s13
        %p232 = scmp.lt.s32.totalorder %s231, 31
        %s233 = scalar_select %p232, %s231, 31
        %s234 = smul.addr %s233, 4
        %s235 = scalar_lea.vmem %s0, %s234
        %s236 = smul.u32 16, %s13
      $region44: #{linear_classifier_forward.1} parent=39 // pred_fallthru
        _
    $region40: #{linear_classifier_forward.1} parent=5 // pred_fallthru
      _
    %p237 = scmp.le.s32.totalorder 1, %s13
    %p238 = scmp.lt.s32.totalorder %s13, 3
    %p239 = pnand %p237, %p238
    %p240 = pneg %p239
    // Predicated region
    $region45: #{linear_classifier_forward.1} parent=5 // pred_check
      _
    $region46: #{linear_classifier_forward.1} parent=5 // pred_check_branch
      %242 = sbr.rel (%p239) target = $region48
    $region47: #{linear_classifier_forward.1} parent=5 // pred_region
      %s243 = ssub.s32 %s13, 1
      %s244 = smul.u32 16, %s18
      %p245 = scmp.lt.s32.totalorder %s244, 31
      %s246 = scalar_select %p245, %s244, 31
      %s247 = smul.addr %s246, 4
      %s248 = scalar_lea.vmem %s0, %s247
      %p249 = pneg %p39
      %p250 = pneg %p36
      %p251 = pneg %p60
      %p252 = pneg %p57
      %p253 = pneg %p81
      %p254 = pneg %p78
      %p255 = pneg %p102
      %p256 = pneg %p99
      %p257 = pneg %p123
      %p258 = pneg %p120
      %p259 = pneg %p144
      %p260 = pneg %p141
      %p261 = pneg %p165
      %p262 = pneg %p162
      %p263 = pneg %p191
      %p264 = pneg %p188
      %s265 = smul.u32 16, %s18
      %p266 = scmp.lt.s32.totalorder %s265, 31
      %s267 = scalar_select %p266, %s265, 31
      %s268 = smul.addr %s267, 8
      %s269 = scalar_lea.vmem %s7, %s268
      %s270 = smul.u32 16, %s18
      %p271 = scmp.lt.s32.totalorder %s270, 31
      %s272 = scalar_select %p271, %s270, 31
      %s273 = smul.addr %s272, 4
      %s274 = scalar_lea.vmem %s0, %s273
      %s275 = smul.u32 16, %s18
      %s276 = smul.u32 16, %s18
      %p277 = scmp.lt.s32.totalorder %s276, 31
      %s278 = scalar_select %p277, %s276, 31
      %s279 = smul.addr %s278, 8
      %s280 = scalar_lea.vmem %s7, %s279
      %s281 = smul.u32 16, %s18
      %v283 = vld [vmem:[%s274] sm:$0xf]
      %v284 = vld [vmem:[%s274 + $0x4] sm:$0xf]
      %v285 = vld [vmem:[%s274 + $0x8] sm:$0xf]
      %v286 = vld [vmem:[%s274 + $0xc] sm:$0xf]
      %v287 = vld [vmem:[%s274 + $0x10] sm:$0xf]
      %v288 = vld [vmem:[%s274 + $0x14] sm:$0xf]
      %v289 = vld [vmem:[%s274 + $0x18] sm:$0xf]
      %v290 = vld [vmem:[%s274 + $0x1c] sm:$0xf]
      %v291 = vld [vmem:[%s274 + $0x20] sm:$0xf]
      %v292 = vld [vmem:[%s274 + $0x24] sm:$0xf]
      %v293 = vld [vmem:[%s274 + $0x28] sm:$0xf]
      %v294 = vld [vmem:[%s274 + $0x2c] sm:$0xf]
      %v295 = vld [vmem:[%s274 + $0x30] sm:$0xf]
      %v296 = vld [vmem:[%s274 + $0x34] sm:$0xf]
      %v297 = vld [vmem:[%s274 + $0x38] sm:$0xf]
      %v298 = vld [vmem:[%s274 + $0x3c] sm:$0xf]
      %v299 = vld [vmem:[%s1] sm:$0xf]
      %v300 = vld [vmem:[%s1 + $0x4] sm:$0xf]
      %v301 = vld [vmem:[%s1 + $0x8] sm:$0xf]
      %v302 = vld [vmem:[%s1 + $0xc] sm:$0xf]
      %v303 = vld [vmem:[%s2] sm:$0x1]
      %v305 = vperm.slane %v303, 0
      %v323 = vunpack.c.l.b16 %v283
      %v324 = vunpack.c.l.b16 %v284
      %v325 = vunpack.c.l.b16 %v285
      %v326 = vunpack.c.l.b16 %v286
      %v327 = vunpack.c.l.b16 %v287
      %v328 = vunpack.c.l.b16 %v288
      %v329 = vunpack.c.l.b16 %v289
      %v330 = vunpack.c.l.b16 %v290
      %v331 = vunpack.c.l.b16 %v291
      %v332 = vunpack.c.l.b16 %v292
      %v333 = vunpack.c.l.b16 %v293
      %v334 = vunpack.c.l.b16 %v294
      %v335 = vunpack.c.l.b16 %v295
      %v336 = vunpack.c.l.b16 %v296
      %v337 = vunpack.c.l.b16 %v297
      %v338 = vunpack.c.l.b16 %v298
      %v339 = vpack.c.b16 %v324, %v323
      %v340 = vpack.c.b16 %v326, %v325
      %v341 = vpack.c.b16 %v328, %v327
      %v342 = vpack.c.b16 %v330, %v329
      %v343 = vpack.c.b16 %v332, %v331
      %v344 = vpack.c.b16 %v334, %v333
      %v345 = vpack.c.b16 %v336, %v335
      %v346 = vpack.c.b16 %v338, %v337
      %v351 = vunpack.c.l.b16 %v299
      %v352 = vunpack.c.l.b16 %v300
      %v353 = vunpack.c.l.b16 %v301
      %v354 = vunpack.c.l.b16 %v302
      %v355 = vpack.c.b16 %v352, %v351
      %v356 = vpack.c.b16 %v354, %v353
      %vm359 = vcmask 261120
      %v361 = vsel %vm359, %v339, 0
      %v364 = vsel %vm359, %v340, 0
      %v367 = vsel %vm359, %v341, 0
      %v370 = vsel %vm359, %v342, 0
      %v373 = vsel %vm359, %v343, 0
      %v376 = vsel %vm359, %v344, 0
      %v379 = vsel %vm359, %v345, 0
      %v382 = vsel %vm359, %v346, 0
      %384 = vmatpush.bf16.msra.mxu0 0
      %385 = vmatpush.bf16.msra.mxu0 0
      %386 = vmatpush.bf16.msra.mxu0 0
      %387 = vmatpush.bf16.msra.mxu0 0
      %388 = vmatpush.bf16.msra.mxu0 0
      %389 = vmatpush.bf16.msra.mxu0 0
      %390 = vmatpush.bf16.msra.mxu0 %v356
      %391 = vmatpush.bf16.msra.mxu0 %v355
      %392 = vmatmul.bf16.gmra.mxu0 %v361
      %v393 = vpop.f32.mrf.mxu0
      %v394 = vadd.f32 %v305, %v393
      %v395 = vpop.f32.mrf.mxu0
      %v396 = vadd.f32 %v305, %v395
      %397 = vmatmul.bf16.gmra.mxu0 %v364
      %v398 = vpop.f32.mrf.mxu0
      %v399 = vadd.f32 %v305, %v398
      %v400 = vpop.f32.mrf.mxu0
      %v401 = vadd.f32 %v305, %v400
      %402 = vmatmul.bf16.gmra.mxu0 %v367
      %v403 = vpop.f32.mrf.mxu0
      %v404 = vadd.f32 %v305, %v403
      %v405 = vpop.f32.mrf.mxu0
      %v406 = vadd.f32 %v305, %v405
      %407 = vmatmul.bf16.gmra.mxu0 %v370
      %v408 = vpop.f32.mrf.mxu0
      %v409 = vadd.f32 %v305, %v408
      %v410 = vpop.f32.mrf.mxu0
      %v411 = vadd.f32 %v305, %v410
      %412 = vmatmul.bf16.gmra.mxu0 %v373
      %v413 = vpop.f32.mrf.mxu0
      %v414 = vadd.f32 %v305, %v413
      %v415 = vpop.f32.mrf.mxu0
      %v416 = vadd.f32 %v305, %v415
      %417 = vmatmul.bf16.gmra.mxu0 %v376
      %v418 = vpop.f32.mrf.mxu0
      %v419 = vadd.f32 %v305, %v418
      %v420 = vpop.f32.mrf.mxu0
      %v421 = vadd.f32 %v305, %v420
      %422 = vmatmul.bf16.gmra.mxu0 %v379
      %v423 = vpop.f32.mrf.mxu0
      %v424 = vadd.f32 %v305, %v423
      %v425 = vpop.f32.mrf.mxu0
      %v426 = vadd.f32 %v305, %v425
      %427 = vmatmul.bf16.gmra.mxu0 %v382
      %v428 = vpop.f32.mrf.mxu0
      %v429 = vadd.f32 %v305, %v428
      %v430 = vpop.f32.mrf.mxu0
      %v431 = vadd.f32 %v305, %v430
      %432 = vdwg.mxu0
      %v433 = vxor.u32 %v394, 2147483648
      %v434 = vxor.u32 %v396, 2147483648
      %v435 = vxor.u32 %v399, 2147483648
      %v436 = vxor.u32 %v401, 2147483648
      %v437 = vxor.u32 %v404, 2147483648
      %v438 = vxor.u32 %v406, 2147483648
      %v439 = vxor.u32 %v409, 2147483648
      %v440 = vxor.u32 %v411, 2147483648
      %v441 = vxor.u32 %v414, 2147483648
      %v442 = vxor.u32 %v416, 2147483648
      %v443 = vxor.u32 %v419, 2147483648
      %v444 = vxor.u32 %v421, 2147483648
      %v445 = vxor.u32 %v424, 2147483648
      %v446 = vxor.u32 %v426, 2147483648
      %v447 = vxor.u32 %v429, 2147483648
      %v448 = vxor.u32 %v431, 2147483648
      %v449 = vmul.f32 %v433, 1.442695
      %v450 = vpow.pop %v449
      %v451 = vmul.f32 %v434, 1.442695
      %v452 = vpow.pop %v451
      %v453 = vmul.f32 %v435, 1.442695
      %v454 = vpow.pop %v453
      %v455 = vmul.f32 %v436, 1.442695
      %v456 = vpow.pop %v455
      %v457 = vmul.f32 %v437, 1.442695
      %v458 = vpow.pop %v457
      %v459 = vmul.f32 %v438, 1.442695
      %v460 = vpow.pop %v459
      %v461 = vmul.f32 %v439, 1.442695
      %v462 = vpow.pop %v461
      %v463 = vmul.f32 %v440, 1.442695
      %v464 = vpow.pop %v463
      %v465 = vmul.f32 %v441, 1.442695
      %v466 = vpow.pop %v465
      %v467 = vmul.f32 %v442, 1.442695
      %v468 = vpow.pop %v467
      %v469 = vmul.f32 %v443, 1.442695
      %v470 = vpow.pop %v469
      %v471 = vmul.f32 %v444, 1.442695
      %v472 = vpow.pop %v471
      %v473 = vmul.f32 %v445, 1.442695
      %v474 = vpow.pop %v473
      %v475 = vmul.f32 %v446, 1.442695
      %v476 = vpow.pop %v475
      %v477 = vmul.f32 %v447, 1.442695
      %v478 = vpow.pop %v477
      %v479 = vmul.f32 %v448, 1.442695
      %v480 = vpow.pop %v479
      %v481 = vadd.f32 %v450, 1.0
      %v482 = vadd.f32 %v452, 1.0
      %v483 = vadd.f32 %v454, 1.0
      %v484 = vadd.f32 %v456, 1.0
      %v485 = vadd.f32 %v458, 1.0
      %v486 = vadd.f32 %v460, 1.0
      %v487 = vadd.f32 %v462, 1.0
      %v488 = vadd.f32 %v464, 1.0
      %v489 = vadd.f32 %v466, 1.0
      %v490 = vadd.f32 %v468, 1.0
      %v491 = vadd.f32 %v470, 1.0
      %v492 = vadd.f32 %v472, 1.0
      %v493 = vadd.f32 %v474, 1.0
      %v494 = vadd.f32 %v476, 1.0
      %v495 = vadd.f32 %v478, 1.0
      %v496 = vadd.f32 %v480, 1.0
      %v497 = vrcp.pop %v481
      %v498 = vmul.f32 %v481, %v497
      %v499 = vsub.f32 1.0, %v498
      %v500 = vmul.f32 %v497, %v499
      %v501 = vadd.f32 %v497, %v500
      %vm502 = vweird.f32 %v481
      %vm503 = vweird.f32 %v497
      %vm504 = vmor %vm502, %vm503
      %v505 = vsel %vm504, %v497, %v501
      %v506 = vand.u32 2147483647, %v481
      %vm507 = vcmp.eq.f32.partialorder %v506, 8.507059e+37
      %v508 = vand.u32 %v481, 2147483648
      %v509 = vor.u32 1.1754944e-38, %v508
      %v510 = vsel %vm507, %v509, %v505
      %v511 = vmul.f32 1.0, %v510
      %v512 = vrcp.pop %v482
      %v513 = vmul.f32 %v482, %v512
      %v514 = vsub.f32 1.0, %v513
      %v515 = vmul.f32 %v512, %v514
      %v516 = vadd.f32 %v512, %v515
      %vm517 = vweird.f32 %v482
      %vm518 = vweird.f32 %v512
      %vm519 = vmor %vm517, %vm518
      %v520 = vsel %vm519, %v512, %v516
      %v521 = vand.u32 2147483647, %v482
      %vm522 = vcmp.eq.f32.partialorder %v521, 8.507059e+37
      %v523 = vand.u32 %v482, 2147483648
      %v524 = vor.u32 1.1754944e-38, %v523
      %v525 = vsel %vm522, %v524, %v520
      %v526 = vmul.f32 1.0, %v525
      %v527 = vrcp.pop %v483
      %v528 = vmul.f32 %v483, %v527
      %v529 = vsub.f32 1.0, %v528
      %v530 = vmul.f32 %v527, %v529
      %v531 = vadd.f32 %v527, %v530
      %vm532 = vweird.f32 %v483
      %vm533 = vweird.f32 %v527
      %vm534 = vmor %vm532, %vm533
      %v535 = vsel %vm534, %v527, %v531
      %v536 = vand.u32 2147483647, %v483
      %vm537 = vcmp.eq.f32.partialorder %v536, 8.507059e+37
      %v538 = vand.u32 %v483, 2147483648
      %v539 = vor.u32 1.1754944e-38, %v538
      %v540 = vsel %vm537, %v539, %v535
      %v541 = vmul.f32 1.0, %v540
      %v542 = vrcp.pop %v484
      %v543 = vmul.f32 %v484, %v542
      %v544 = vsub.f32 1.0, %v543
      %v545 = vmul.f32 %v542, %v544
      %v546 = vadd.f32 %v542, %v545
      %vm547 = vweird.f32 %v484
      %vm548 = vweird.f32 %v542
      %vm549 = vmor %vm547, %vm548
      %v550 = vsel %vm549, %v542, %v546
      %v551 = vand.u32 2147483647, %v484
      %vm552 = vcmp.eq.f32.partialorder %v551, 8.507059e+37
      %v553 = vand.u32 %v484, 2147483648
      %v554 = vor.u32 1.1754944e-38, %v553
      %v555 = vsel %vm552, %v554, %v550
      %v556 = vmul.f32 1.0, %v555
      %v557 = vrcp.pop %v485
      %v558 = vmul.f32 %v485, %v557
      %v559 = vsub.f32 1.0, %v558
      %v560 = vmul.f32 %v557, %v559
      %v561 = vadd.f32 %v557, %v560
      %vm562 = vweird.f32 %v485
      %vm563 = vweird.f32 %v557
      %vm564 = vmor %vm562, %vm563
      %v565 = vsel %vm564, %v557, %v561
      %v566 = vand.u32 2147483647, %v485
      %vm567 = vcmp.eq.f32.partialorder %v566, 8.507059e+37
      %v568 = vand.u32 %v485, 2147483648
      %v569 = vor.u32 1.1754944e-38, %v568
      %v570 = vsel %vm567, %v569, %v565
      %v571 = vmul.f32 1.0, %v570
      %v572 = vrcp.pop %v486
      %v573 = vmul.f32 %v486, %v572
      %v574 = vsub.f32 1.0, %v573
      %v575 = vmul.f32 %v572, %v574
      %v576 = vadd.f32 %v572, %v575
      %vm577 = vweird.f32 %v486
      %vm578 = vweird.f32 %v572
      %vm579 = vmor %vm577, %vm578
      %v580 = vsel %vm579, %v572, %v576
      %v581 = vand.u32 2147483647, %v486
      %vm582 = vcmp.eq.f32.partialorder %v581, 8.507059e+37
      %v583 = vand.u32 %v486, 2147483648
      %v584 = vor.u32 1.1754944e-38, %v583
      %v585 = vsel %vm582, %v584, %v580
      %v586 = vmul.f32 1.0, %v585
      %v587 = vrcp.pop %v487
      %v588 = vmul.f32 %v487, %v587
      %v589 = vsub.f32 1.0, %v588
      %v590 = vmul.f32 %v587, %v589
      %v591 = vadd.f32 %v587, %v590
      %vm592 = vweird.f32 %v487
      %vm593 = vweird.f32 %v587
      %vm594 = vmor %vm592, %vm593
      %v595 = vsel %vm594, %v587, %v591
      %v596 = vand.u32 2147483647, %v487
      %vm597 = vcmp.eq.f32.partialorder %v596, 8.507059e+37
      %v598 = vand.u32 %v487, 2147483648
      %v599 = vor.u32 1.1754944e-38, %v598
      %v600 = vsel %vm597, %v599, %v595
      %v601 = vmul.f32 1.0, %v600
      %v602 = vrcp.pop %v488
      %v603 = vmul.f32 %v488, %v602
      %v604 = vsub.f32 1.0, %v603
      %v605 = vmul.f32 %v602, %v604
      %v606 = vadd.f32 %v602, %v605
      %vm607 = vweird.f32 %v488
      %vm608 = vweird.f32 %v602
      %vm609 = vmor %vm607, %vm608
      %v610 = vsel %vm609, %v602, %v606
      %v611 = vand.u32 2147483647, %v488
      %vm612 = vcmp.eq.f32.partialorder %v611, 8.507059e+37
      %v613 = vand.u32 %v488, 2147483648
      %v614 = vor.u32 1.1754944e-38, %v613
      %v615 = vsel %vm612, %v614, %v610
      %v616 = vmul.f32 1.0, %v615
      %v617 = vrcp.pop %v489
      %v618 = vmul.f32 %v489, %v617
      %v619 = vsub.f32 1.0, %v618
      %v620 = vmul.f32 %v617, %v619
      %v621 = vadd.f32 %v617, %v620
      %vm622 = vweird.f32 %v489
      %vm623 = vweird.f32 %v617
      %vm624 = vmor %vm622, %vm623
      %v625 = vsel %vm624, %v617, %v621
      %v626 = vand.u32 2147483647, %v489
      %vm627 = vcmp.eq.f32.partialorder %v626, 8.507059e+37
      %v628 = vand.u32 %v489, 2147483648
      %v629 = vor.u32 1.1754944e-38, %v628
      %v630 = vsel %vm627, %v629, %v625
      %v631 = vmul.f32 1.0, %v630
      %v632 = vrcp.pop %v490
      %v633 = vmul.f32 %v490, %v632
      %v634 = vsub.f32 1.0, %v633
      %v635 = vmul.f32 %v632, %v634
      %v636 = vadd.f32 %v632, %v635
      %vm637 = vweird.f32 %v490
      %vm638 = vweird.f32 %v632
      %vm639 = vmor %vm637, %vm638
      %v640 = vsel %vm639, %v632, %v636
      %v641 = vand.u32 2147483647, %v490
      %vm642 = vcmp.eq.f32.partialorder %v641, 8.507059e+37
      %v643 = vand.u32 %v490, 2147483648
      %v644 = vor.u32 1.1754944e-38, %v643
      %v645 = vsel %vm642, %v644, %v640
      %v646 = vmul.f32 1.0, %v645
      %v647 = vrcp.pop %v491
      %v648 = vmul.f32 %v491, %v647
      %v649 = vsub.f32 1.0, %v648
      %v650 = vmul.f32 %v647, %v649
      %v651 = vadd.f32 %v647, %v650
      %vm652 = vweird.f32 %v491
      %vm653 = vweird.f32 %v647
      %vm654 = vmor %vm652, %vm653
      %v655 = vsel %vm654, %v647, %v651
      %v656 = vand.u32 2147483647, %v491
      %vm657 = vcmp.eq.f32.partialorder %v656, 8.507059e+37
      %v658 = vand.u32 %v491, 2147483648
      %v659 = vor.u32 1.1754944e-38, %v658
      %v660 = vsel %vm657, %v659, %v655
      %v661 = vmul.f32 1.0, %v660
      %v662 = vrcp.pop %v492
      %v663 = vmul.f32 %v492, %v662
      %v664 = vsub.f32 1.0, %v663
      %v665 = vmul.f32 %v662, %v664
      %v666 = vadd.f32 %v662, %v665
      %vm667 = vweird.f32 %v492
      %vm668 = vweird.f32 %v662
      %vm669 = vmor %vm667, %vm668
      %v670 = vsel %vm669, %v662, %v666
      %v671 = vand.u32 2147483647, %v492
      %vm672 = vcmp.eq.f32.partialorder %v671, 8.507059e+37
      %v673 = vand.u32 %v492, 2147483648
      %v674 = vor.u32 1.1754944e-38, %v673
      %v675 = vsel %vm672, %v674, %v670
      %v676 = vmul.f32 1.0, %v675
      %v677 = vrcp.pop %v493
      %v678 = vmul.f32 %v493, %v677
      %v679 = vsub.f32 1.0, %v678
      %v680 = vmul.f32 %v677, %v679
      %v681 = vadd.f32 %v677, %v680
      %vm682 = vweird.f32 %v493
      %vm683 = vweird.f32 %v677
      %vm684 = vmor %vm682, %vm683
      %v685 = vsel %vm684, %v677, %v681
      %v686 = vand.u32 2147483647, %v493
      %vm687 = vcmp.eq.f32.partialorder %v686, 8.507059e+37
      %v688 = vand.u32 %v493, 2147483648
      %v689 = vor.u32 1.1754944e-38, %v688
      %v690 = vsel %vm687, %v689, %v685
      %v691 = vmul.f32 1.0, %v690
      %v692 = vrcp.pop %v494
      %v693 = vmul.f32 %v494, %v692
      %v694 = vsub.f32 1.0, %v693
      %v695 = vmul.f32 %v692, %v694
      %v696 = vadd.f32 %v692, %v695
      %vm697 = vweird.f32 %v494
      %vm698 = vweird.f32 %v692
      %vm699 = vmor %vm697, %vm698
      %v700 = vsel %vm699, %v692, %v696
      %v701 = vand.u32 2147483647, %v494
      %vm702 = vcmp.eq.f32.partialorder %v701, 8.507059e+37
      %v703 = vand.u32 %v494, 2147483648
      %v704 = vor.u32 1.1754944e-38, %v703
      %v705 = vsel %vm702, %v704, %v700
      %v706 = vmul.f32 1.0, %v705
      %v707 = vrcp.pop %v495
      %v708 = vmul.f32 %v495, %v707
      %v709 = vsub.f32 1.0, %v708
      %v710 = vmul.f32 %v707, %v709
      %v711 = vadd.f32 %v707, %v710
      %vm712 = vweird.f32 %v495
      %vm713 = vweird.f32 %v707
      %vm714 = vmor %vm712, %vm713
      %v715 = vsel %vm714, %v707, %v711
      %v716 = vand.u32 2147483647, %v495
      %vm717 = vcmp.eq.f32.partialorder %v716, 8.507059e+37
      %v718 = vand.u32 %v495, 2147483648
      %v719 = vor.u32 1.1754944e-38, %v718
      %v720 = vsel %vm717, %v719, %v715
      %v721 = vmul.f32 1.0, %v720
      %v722 = vrcp.pop %v496
      %v723 = vmul.f32 %v496, %v722
      %v724 = vsub.f32 1.0, %v723
      %v725 = vmul.f32 %v722, %v724
      %v726 = vadd.f32 %v722, %v725
      %vm727 = vweird.f32 %v496
      %vm728 = vweird.f32 %v722
      %vm729 = vmor %vm727, %vm728
      %v730 = vsel %vm729, %v722, %v726
      %v731 = vand.u32 2147483647, %v496
      %vm732 = vcmp.eq.f32.partialorder %v731, 8.507059e+37
      %v733 = vand.u32 %v496, 2147483648
      %v734 = vor.u32 1.1754944e-38, %v733
      %v735 = vsel %vm732, %v734, %v730
      %v736 = vmul.f32 1.0, %v735
      %v737 = vpack.c.bf16 %v526, %v511
      %v738 = vpack.c.bf16 %v556, %v541
      %v739 = vpack.c.bf16 %v586, %v571
      %v740 = vpack.c.bf16 %v616, %v601
      %v741 = vpack.c.bf16 %v646, %v631
      %v742 = vpack.c.bf16 %v676, %v661
      %v743 = vpack.c.bf16 %v706, %v691
      %v744 = vpack.c.bf16 %v736, %v721
      %v745 = vld [vmem:[%s3] sm:$0xff]
      %v746 = vld [vmem:[%s3 + $0x8] sm:$0xff]
      %v747 = vld [vmem:[%s3 + $0x10] sm:$0xff]
      %v748 = vld [vmem:[%s3 + $0x18] sm:$0xff]
      %v749 = vld [vmem:[%s3 + $0x20] sm:$0xff]
      %v750 = vld [vmem:[%s3 + $0x28] sm:$0xff]
      %v751 = vld [vmem:[%s3 + $0x30] sm:$0xff]
      %v752 = vld [vmem:[%s3 + $0x38] sm:$0xff]
      %v753 = vld [vmem:[%s3 + $0x40] sm:$0xff]
      %v754 = vld [vmem:[%s3 + $0x48] sm:$0xff]
      %v755 = vld [vmem:[%s3 + $0x50] sm:$0xff]
      %v756 = vld [vmem:[%s3 + $0x58] sm:$0xff]
      %v757 = vld [vmem:[%s3 + $0x60] sm:$0xff]
      %v758 = vld [vmem:[%s3 + $0x68] sm:$0xff]
      %v759 = vld [vmem:[%s3 + $0x70] sm:$0xff]
      %v760 = vld [vmem:[%s3 + $0x78] sm:$0xff]
      %v761 = vld [vmem:[%s4] sm:$0x3]
      %v763 = vperm.slane %v761, 0
      %v764 = vperm.slane %v761, 1
      %v783 = vunpack.c.l.b16 %v745
      %v784 = vunpack.c.h.b16 %v745
      %v785 = vunpack.c.l.b16 %v746
      %v786 = vunpack.c.h.b16 %v746
      %v787 = vunpack.c.l.b16 %v747
      %v788 = vunpack.c.h.b16 %v747
      %v789 = vunpack.c.l.b16 %v748
      %v790 = vunpack.c.h.b16 %v748
      %v791 = vunpack.c.l.b16 %v749
      %v792 = vunpack.c.h.b16 %v749
      %v793 = vunpack.c.l.b16 %v750
      %v794 = vunpack.c.h.b16 %v750
      %v795 = vunpack.c.l.b16 %v751
      %v796 = vunpack.c.h.b16 %v751
      %v797 = vunpack.c.l.b16 %v752
      %v798 = vunpack.c.h.b16 %v752
      %v799 = vunpack.c.l.b16 %v753
      %v800 = vunpack.c.h.b16 %v753
      %v801 = vunpack.c.l.b16 %v754
      %v802 = vunpack.c.h.b16 %v754
      %v803 = vunpack.c.l.b16 %v755
      %v804 = vunpack.c.h.b16 %v755
      %v805 = vunpack.c.l.b16 %v756
      %v806 = vunpack.c.h.b16 %v756
      %v807 = vunpack.c.l.b16 %v757
      %v808 = vunpack.c.h.b16 %v757
      %v809 = vunpack.c.l.b16 %v758
      %v810 = vunpack.c.h.b16 %v758
      %v811 = vunpack.c.l.b16 %v759
      %v812 = vunpack.c.h.b16 %v759
      %v813 = vunpack.c.l.b16 %v760
      %v814 = vunpack.c.h.b16 %v760
      %v815 = vpack.c.b16 %v785, %v783
      %v816 = vpack.c.b16 %v786, %v784
      %v817 = vpack.c.b16 %v789, %v787
      %v818 = vpack.c.b16 %v790, %v788
      %v819 = vpack.c.b16 %v793, %v791
      %v820 = vpack.c.b16 %v794, %v792
      %v821 = vpack.c.b16 %v797, %v795
      %v822 = vpack.c.b16 %v798, %v796
      %v823 = vpack.c.b16 %v801, %v799
      %v824 = vpack.c.b16 %v802, %v800
      %v825 = vpack.c.b16 %v805, %v803
      %v826 = vpack.c.b16 %v806, %v804
      %v827 = vpack.c.b16 %v809, %v807
      %v828 = vpack.c.b16 %v810, %v808
      %v829 = vpack.c.b16 %v813, %v811
      %v830 = vpack.c.b16 %v814, %v812
      %847 = vmatpush.bf16.msra.mxu0 %v829
      %848 = vmatpush.bf16.msra.mxu0 %v827
      %849 = vmatpush.bf16.msra.mxu0 %v825
      %850 = vmatpush.bf16.msra.mxu0 %v823
      %851 = vmatpush.bf16.msra.mxu0 %v821
      %852 = vmatpush.bf16.msra.mxu0 %v819
      %853 = vmatpush.bf16.msra.mxu0 %v817
      %854 = vmatpush.bf16.msra.mxu0 %v815
      %855 = vmatmul.bf16.gmra.mxu0 %v737
      %v856 = vpop.f32.mrf.mxu0
      %v857 = vadd.f32 %v763, %v856
      %v858 = vpop.f32.mrf.mxu0
      %v859 = vadd.f32 %v763, %v858
      %860 = vmatmul.bf16.gmra.mxu0 %v738
      %v861 = vpop.f32.mrf.mxu0
      %v862 = vadd.f32 %v763, %v861
      %v863 = vpop.f32.mrf.mxu0
      %v864 = vadd.f32 %v763, %v863
      %865 = vmatmul.bf16.gmra.mxu0 %v739
      %v866 = vpop.f32.mrf.mxu0
      %v867 = vadd.f32 %v763, %v866
      %v868 = vpop.f32.mrf.mxu0
      %v869 = vadd.f32 %v763, %v868
      %870 = vmatmul.bf16.gmra.mxu0 %v740
      %v871 = vpop.f32.mrf.mxu0
      %v872 = vadd.f32 %v763, %v871
      %v873 = vpop.f32.mrf.mxu0
      %v874 = vadd.f32 %v763, %v873
      %875 = vmatmul.bf16.gmra.mxu0 %v741
      %v876 = vpop.f32.mrf.mxu0
      %v877 = vadd.f32 %v763, %v876
      %v878 = vpop.f32.mrf.mxu0
      %v879 = vadd.f32 %v763, %v878
      %880 = vmatmul.bf16.gmra.mxu0 %v742
      %v881 = vpop.f32.mrf.mxu0
      %v882 = vadd.f32 %v763, %v881
      %v883 = vpop.f32.mrf.mxu0
      %v884 = vadd.f32 %v763, %v883
      %885 = vmatmul.bf16.gmra.mxu0 %v743
      %v886 = vpop.f32.mrf.mxu0
      %v887 = vadd.f32 %v763, %v886
      %v888 = vpop.f32.mrf.mxu0
      %v889 = vadd.f32 %v763, %v888
      %890 = vmatmul.bf16.gmra.mxu0 %v744
      %v891 = vpop.f32.mrf.mxu0
      %v892 = vadd.f32 %v763, %v891
      %v893 = vpop.f32.mrf.mxu0
      %v894 = vadd.f32 %v763, %v893
      %895 = vdwg.mxu0
      %896 = vmatpush.bf16.msra.mxu0 %v830
      %897 = vmatpush.bf16.msra.mxu0 %v828
      %898 = vmatpush.bf16.msra.mxu0 %v826
      %899 = vmatpush.bf16.msra.mxu0 %v824
      %900 = vmatpush.bf16.msra.mxu0 %v822
      %901 = vmatpush.bf16.msra.mxu0 %v820
      %902 = vmatpush.bf16.msra.mxu0 %v818
      %903 = vmatpush.bf16.msra.mxu0 %v816
      %904 = vmatmul.bf16.gmra.mxu0 %v737
      %v905 = vpop.f32.mrf.mxu0
      %v906 = vadd.f32 %v764, %v905
      %v907 = vpop.f32.mrf.mxu0
      %v908 = vadd.f32 %v764, %v907
      %909 = vmatmul.bf16.gmra.mxu0 %v738
      %v910 = vpop.f32.mrf.mxu0
      %v911 = vadd.f32 %v764, %v910
      %v912 = vpop.f32.mrf.mxu0
      %v913 = vadd.f32 %v764, %v912
      %914 = vmatmul.bf16.gmra.mxu0 %v739
      %v915 = vpop.f32.mrf.mxu0
      %v916 = vadd.f32 %v764, %v915
      %v917 = vpop.f32.mrf.mxu0
      %v918 = vadd.f32 %v764, %v917
      %919 = vmatmul.bf16.gmra.mxu0 %v740
      %v920 = vpop.f32.mrf.mxu0
      %v921 = vadd.f32 %v764, %v920
      %v922 = vpop.f32.mrf.mxu0
      %v923 = vadd.f32 %v764, %v922
      %924 = vmatmul.bf16.gmra.mxu0 %v741
      %v925 = vpop.f32.mrf.mxu0
      %v926 = vadd.f32 %v764, %v925
      %v927 = vpop.f32.mrf.mxu0
      %v928 = vadd.f32 %v764, %v927
      %929 = vmatmul.bf16.gmra.mxu0 %v742
      %v930 = vpop.f32.mrf.mxu0
      %v931 = vadd.f32 %v764, %v930
      %v932 = vpop.f32.mrf.mxu0
      %v933 = vadd.f32 %v764, %v932
      %934 = vmatmul.bf16.gmra.mxu0 %v743
      %v935 = vpop.f32.mrf.mxu0
      %v936 = vadd.f32 %v764, %v935
      %v937 = vpop.f32.mrf.mxu0
      %v938 = vadd.f32 %v764, %v937
      %939 = vmatmul.bf16.gmra.mxu0 %v744
      %v940 = vpop.f32.mrf.mxu0
      %v941 = vadd.f32 %v764, %v940
      %v942 = vpop.f32.mrf.mxu0
      %v943 = vadd.f32 %v764, %v942
      %944 = vdwg.mxu0
      %v945 = vxor.u32 %v857, 2147483648
      %v946 = vxor.u32 %v906, 2147483648
      %v947 = vxor.u32 %v859, 2147483648
      %v948 = vxor.u32 %v908, 2147483648
      %v949 = vxor.u32 %v862, 2147483648
      %v950 = vxor.u32 %v911, 2147483648
      %v951 = vxor.u32 %v864, 2147483648
      %v952 = vxor.u32 %v913, 2147483648
      %v953 = vxor.u32 %v867, 2147483648
      %v954 = vxor.u32 %v916, 2147483648
      %v955 = vxor.u32 %v869, 2147483648
      %v956 = vxor.u32 %v918, 2147483648
      %v957 = vxor.u32 %v872, 2147483648
      %v958 = vxor.u32 %v921, 2147483648
      %v959 = vxor.u32 %v874, 2147483648
      %v960 = vxor.u32 %v923, 2147483648
      %v961 = vxor.u32 %v877, 2147483648
      %v962 = vxor.u32 %v926, 2147483648
      %v963 = vxor.u32 %v879, 2147483648
      %v964 = vxor.u32 %v928, 2147483648
      %v965 = vxor.u32 %v882, 2147483648
      %v966 = vxor.u32 %v931, 2147483648
      %v967 = vxor.u32 %v884, 2147483648
      %v968 = vxor.u32 %v933, 2147483648
      %v969 = vxor.u32 %v887, 2147483648
      %v970 = vxor.u32 %v936, 2147483648
      %v971 = vxor.u32 %v889, 2147483648
      %v972 = vxor.u32 %v938, 2147483648
      %v973 = vxor.u32 %v892, 2147483648
      %v974 = vxor.u32 %v941, 2147483648
      %v975 = vxor.u32 %v894, 2147483648
      %v976 = vxor.u32 %v943, 2147483648
      %v977 = vmul.f32 %v945, 1.442695
      %v978 = vpow.pop %v977
      %v979 = vmul.f32 %v946, 1.442695
      %v980 = vpow.pop %v979
      %v981 = vmul.f32 %v947, 1.442695
      %v982 = vpow.pop %v981
      %v983 = vmul.f32 %v948, 1.442695
      %v984 = vpow.pop %v983
      %v985 = vmul.f32 %v949, 1.442695
      %v986 = vpow.pop %v985
      %v987 = vmul.f32 %v950, 1.442695
      %v988 = vpow.pop %v987
      %v989 = vmul.f32 %v951, 1.442695
      %v990 = vpow.pop %v989
      %v991 = vmul.f32 %v952, 1.442695
      %v992 = vpow.pop %v991
      %v993 = vmul.f32 %v953, 1.442695
      %v994 = vpow.pop %v993
      %v995 = vmul.f32 %v954, 1.442695
      %v996 = vpow.pop %v995
      %v997 = vmul.f32 %v955, 1.442695
      %v998 = vpow.pop %v997
      %v999 = vmul.f32 %v956, 1.442695
      %v1000 = vpow.pop %v999
      %v1001 = vmul.f32 %v957, 1.442695
      %v1002 = vpow.pop %v1001
      %v1003 = vmul.f32 %v958, 1.442695
      %v1004 = vpow.pop %v1003
      %v1005 = vmul.f32 %v959, 1.442695
      %v1006 = vpow.pop %v1005
      %v1007 = vmul.f32 %v960, 1.442695
      %v1008 = vpow.pop %v1007
      %v1009 = vmul.f32 %v961, 1.442695
      %v1010 = vpow.pop %v1009
      %v1011 = vmul.f32 %v962, 1.442695
      %v1012 = vpow.pop %v1011
      %v1013 = vmul.f32 %v963, 1.442695
      %v1014 = vpow.pop %v1013
      %v1015 = vmul.f32 %v964, 1.442695
      %v1016 = vpow.pop %v1015
      %v1017 = vmul.f32 %v965, 1.442695
      %v1018 = vpow.pop %v1017
      %v1019 = vmul.f32 %v966, 1.442695
      %v1020 = vpow.pop %v1019
      %v1021 = vmul.f32 %v967, 1.442695
      %v1022 = vpow.pop %v1021
      %v1023 = vmul.f32 %v968, 1.442695
      %v1024 = vpow.pop %v1023
      %v1025 = vmul.f32 %v969, 1.442695
      %v1026 = vpow.pop %v1025
      %v1027 = vmul.f32 %v970, 1.442695
      %v1028 = vpow.pop %v1027
      %v1029 = vmul.f32 %v971, 1.442695
      %v1030 = vpow.pop %v1029
      %v1031 = vmul.f32 %v972, 1.442695
      %v1032 = vpow.pop %v1031
      %v1033 = vmul.f32 %v973, 1.442695
      %v1034 = vpow.pop %v1033
      %v1035 = vmul.f32 %v974, 1.442695
      %v1036 = vpow.pop %v1035
      %v1037 = vmul.f32 %v975, 1.442695
      %v1038 = vpow.pop %v1037
      %v1039 = vmul.f32 %v976, 1.442695
      %v1040 = vpow.pop %v1039
      %v1041 = vadd.f32 %v978, 1.0
      %v1042 = vadd.f32 %v980, 1.0
      %v1043 = vadd.f32 %v982, 1.0
      %v1044 = vadd.f32 %v984, 1.0
      %v1045 = vadd.f32 %v986, 1.0
      %v1046 = vadd.f32 %v988, 1.0
      %v1047 = vadd.f32 %v990, 1.0
      %v1048 = vadd.f32 %v992, 1.0
      %v1049 = vadd.f32 %v994, 1.0
      %v1050 = vadd.f32 %v996, 1.0
      %v1051 = vadd.f32 %v998, 1.0
      %v1052 = vadd.f32 %v1000, 1.0
      %v1053 = vadd.f32 %v1002, 1.0
      %v1054 = vadd.f32 %v1004, 1.0
      %v1055 = vadd.f32 %v1006, 1.0
      %v1056 = vadd.f32 %v1008, 1.0
      %v1057 = vadd.f32 %v1010, 1.0
      %v1058 = vadd.f32 %v1012, 1.0
      %v1059 = vadd.f32 %v1014, 1.0
      %v1060 = vadd.f32 %v1016, 1.0
      %v1061 = vadd.f32 %v1018, 1.0
      %v1062 = vadd.f32 %v1020, 1.0
      %v1063 = vadd.f32 %v1022, 1.0
      %v1064 = vadd.f32 %v1024, 1.0
      %v1065 = vadd.f32 %v1026, 1.0
      %v1066 = vadd.f32 %v1028, 1.0
      %v1067 = vadd.f32 %v1030, 1.0
      %v1068 = vadd.f32 %v1032, 1.0
      %v1069 = vadd.f32 %v1034, 1.0
      %v1070 = vadd.f32 %v1036, 1.0
      %v1071 = vadd.f32 %v1038, 1.0
      %v1072 = vadd.f32 %v1040, 1.0
      %v1073 = vrcp.pop %v1041
      %v1074 = vmul.f32 %v1041, %v1073
      %v1075 = vsub.f32 1.0, %v1074
      %v1076 = vmul.f32 %v1073, %v1075
      %v1077 = vadd.f32 %v1073, %v1076
      %vm1078 = vweird.f32 %v1041
      %vm1079 = vweird.f32 %v1073
      %vm1080 = vmor %vm1078, %vm1079
      %v1081 = vsel %vm1080, %v1073, %v1077
      %v1082 = vand.u32 2147483647, %v1041
      %vm1083 = vcmp.eq.f32.partialorder %v1082, 8.507059e+37
      %v1084 = vand.u32 %v1041, 2147483648
      %v1085 = vor.u32 1.1754944e-38, %v1084
      %v1086 = vsel %vm1083, %v1085, %v1081
      %v1087 = vmul.f32 1.0, %v1086
      %v1088 = vrcp.pop %v1042
      %v1089 = vmul.f32 %v1042, %v1088
      %v1090 = vsub.f32 1.0, %v1089
      %v1091 = vmul.f32 %v1088, %v1090
      %v1092 = vadd.f32 %v1088, %v1091
      %vm1093 = vweird.f32 %v1042
      %vm1094 = vweird.f32 %v1088
      %vm1095 = vmor %vm1093, %vm1094
      %v1096 = vsel %vm1095, %v1088, %v1092
      %v1097 = vand.u32 2147483647, %v1042
      %vm1098 = vcmp.eq.f32.partialorder %v1097, 8.507059e+37
      %v1099 = vand.u32 %v1042, 2147483648
      %v1100 = vor.u32 1.1754944e-38, %v1099
      %v1101 = vsel %vm1098, %v1100, %v1096
      %v1102 = vmul.f32 1.0, %v1101
      %v1103 = vrcp.pop %v1043
      %v1104 = vmul.f32 %v1043, %v1103
      %v1105 = vsub.f32 1.0, %v1104
      %v1106 = vmul.f32 %v1103, %v1105
      %v1107 = vadd.f32 %v1103, %v1106
      %vm1108 = vweird.f32 %v1043
      %vm1109 = vweird.f32 %v1103
      %vm1110 = vmor %vm1108, %vm1109
      %v1111 = vsel %vm1110, %v1103, %v1107
      %v1112 = vand.u32 2147483647, %v1043
      %vm1113 = vcmp.eq.f32.partialorder %v1112, 8.507059e+37
      %v1114 = vand.u32 %v1043, 2147483648
      %v1115 = vor.u32 1.1754944e-38, %v1114
      %v1116 = vsel %vm1113, %v1115, %v1111
      %v1117 = vmul.f32 1.0, %v1116
      %v1118 = vrcp.pop %v1044
      %v1119 = vmul.f32 %v1044, %v1118
      %v1120 = vsub.f32 1.0, %v1119
      %v1121 = vmul.f32 %v1118, %v1120
      %v1122 = vadd.f32 %v1118, %v1121
      %vm1123 = vweird.f32 %v1044
      %vm1124 = vweird.f32 %v1118
      %vm1125 = vmor %vm1123, %vm1124
      %v1126 = vsel %vm1125, %v1118, %v1122
      %v1127 = vand.u32 2147483647, %v1044
      %vm1128 = vcmp.eq.f32.partialorder %v1127, 8.507059e+37
      %v1129 = vand.u32 %v1044, 2147483648
      %v1130 = vor.u32 1.1754944e-38, %v1129
      %v1131 = vsel %vm1128, %v1130, %v1126
      %v1132 = vmul.f32 1.0, %v1131
      %v1133 = vrcp.pop %v1045
      %v1134 = vmul.f32 %v1045, %v1133
      %v1135 = vsub.f32 1.0, %v1134
      %v1136 = vmul.f32 %v1133, %v1135
      %v1137 = vadd.f32 %v1133, %v1136
      %vm1138 = vweird.f32 %v1045
      %vm1139 = vweird.f32 %v1133
      %vm1140 = vmor %vm1138, %vm1139
      %v1141 = vsel %vm1140, %v1133, %v1137
      %v1142 = vand.u32 2147483647, %v1045
      %vm1143 = vcmp.eq.f32.partialorder %v1142, 8.507059e+37
      %v1144 = vand.u32 %v1045, 2147483648
      %v1145 = vor.u32 1.1754944e-38, %v1144
      %v1146 = vsel %vm1143, %v1145, %v1141
      %v1147 = vmul.f32 1.0, %v1146
      %v1148 = vrcp.pop %v1046
      %v1149 = vmul.f32 %v1046, %v1148
      %v1150 = vsub.f32 1.0, %v1149
      %v1151 = vmul.f32 %v1148, %v1150
      %v1152 = vadd.f32 %v1148, %v1151
      %vm1153 = vweird.f32 %v1046
      %vm1154 = vweird.f32 %v1148
      %vm1155 = vmor %vm1153, %vm1154
      %v1156 = vsel %vm1155, %v1148, %v1152
      %v1157 = vand.u32 2147483647, %v1046
      %vm1158 = vcmp.eq.f32.partialorder %v1157, 8.507059e+37
      %v1159 = vand.u32 %v1046, 2147483648
      %v1160 = vor.u32 1.1754944e-38, %v1159
      %v1161 = vsel %vm1158, %v1160, %v1156
      %v1162 = vmul.f32 1.0, %v1161
      %v1163 = vrcp.pop %v1047
      %v1164 = vmul.f32 %v1047, %v1163
      %v1165 = vsub.f32 1.0, %v1164
      %v1166 = vmul.f32 %v1163, %v1165
      %v1167 = vadd.f32 %v1163, %v1166
      %vm1168 = vweird.f32 %v1047
      %vm1169 = vweird.f32 %v1163
      %vm1170 = vmor %vm1168, %vm1169
      %v1171 = vsel %vm1170, %v1163, %v1167
      %v1172 = vand.u32 2147483647, %v1047
      %vm1173 = vcmp.eq.f32.partialorder %v1172, 8.507059e+37
      %v1174 = vand.u32 %v1047, 2147483648
      %v1175 = vor.u32 1.1754944e-38, %v1174
      %v1176 = vsel %vm1173, %v1175, %v1171
      %v1177 = vmul.f32 1.0, %v1176
      %v1178 = vrcp.pop %v1048
      %v1179 = vmul.f32 %v1048, %v1178
      %v1180 = vsub.f32 1.0, %v1179
      %v1181 = vmul.f32 %v1178, %v1180
      %v1182 = vadd.f32 %v1178, %v1181
      %vm1183 = vweird.f32 %v1048
      %vm1184 = vweird.f32 %v1178
      %vm1185 = vmor %vm1183, %vm1184
      %v1186 = vsel %vm1185, %v1178, %v1182
      %v1187 = vand.u32 2147483647, %v1048
      %vm1188 = vcmp.eq.f32.partialorder %v1187, 8.507059e+37
      %v1189 = vand.u32 %v1048, 2147483648
      %v1190 = vor.u32 1.1754944e-38, %v1189
      %v1191 = vsel %vm1188, %v1190, %v1186
      %v1192 = vmul.f32 1.0, %v1191
      %v1193 = vrcp.pop %v1049
      %v1194 = vmul.f32 %v1049, %v1193
      %v1195 = vsub.f32 1.0, %v1194
      %v1196 = vmul.f32 %v1193, %v1195
      %v1197 = vadd.f32 %v1193, %v1196
      %vm1198 = vweird.f32 %v1049
      %vm1199 = vweird.f32 %v1193
      %vm1200 = vmor %vm1198, %vm1199
      %v1201 = vsel %vm1200, %v1193, %v1197
      %v1202 = vand.u32 2147483647, %v1049
      %vm1203 = vcmp.eq.f32.partialorder %v1202, 8.507059e+37
      %v1204 = vand.u32 %v1049, 2147483648
      %v1205 = vor.u32 1.1754944e-38, %v1204
      %v1206 = vsel %vm1203, %v1205, %v1201
      %v1207 = vmul.f32 1.0, %v1206
      %v1208 = vrcp.pop %v1050
      %v1209 = vmul.f32 %v1050, %v1208
      %v1210 = vsub.f32 1.0, %v1209
      %v1211 = vmul.f32 %v1208, %v1210
      %v1212 = vadd.f32 %v1208, %v1211
      %vm1213 = vweird.f32 %v1050
      %vm1214 = vweird.f32 %v1208
      %vm1215 = vmor %vm1213, %vm1214
      %v1216 = vsel %vm1215, %v1208, %v1212
      %v1217 = vand.u32 2147483647, %v1050
      %vm1218 = vcmp.eq.f32.partialorder %v1217, 8.507059e+37
      %v1219 = vand.u32 %v1050, 2147483648
      %v1220 = vor.u32 1.1754944e-38, %v1219
      %v1221 = vsel %vm1218, %v1220, %v1216
      %v1222 = vmul.f32 1.0, %v1221
      %v1223 = vrcp.pop %v1051
      %v1224 = vmul.f32 %v1051, %v1223
      %v1225 = vsub.f32 1.0, %v1224
      %v1226 = vmul.f32 %v1223, %v1225
      %v1227 = vadd.f32 %v1223, %v1226
      %vm1228 = vweird.f32 %v1051
      %vm1229 = vweird.f32 %v1223
      %vm1230 = vmor %vm1228, %vm1229
      %v1231 = vsel %vm1230, %v1223, %v1227
      %v1232 = vand.u32 2147483647, %v1051
      %vm1233 = vcmp.eq.f32.partialorder %v1232, 8.507059e+37
      %v1234 = vand.u32 %v1051, 2147483648
      %v1235 = vor.u32 1.1754944e-38, %v1234
      %v1236 = vsel %vm1233, %v1235, %v1231
      %v1237 = vmul.f32 1.0, %v1236
      %v1238 = vrcp.pop %v1052
      %v1239 = vmul.f32 %v1052, %v1238
      %v1240 = vsub.f32 1.0, %v1239
      %v1241 = vmul.f32 %v1238, %v1240
      %v1242 = vadd.f32 %v1238, %v1241
      %vm1243 = vweird.f32 %v1052
      %vm1244 = vweird.f32 %v1238
      %vm1245 = vmor %vm1243, %vm1244
      %v1246 = vsel %vm1245, %v1238, %v1242
      %v1247 = vand.u32 2147483647, %v1052
      %vm1248 = vcmp.eq.f32.partialorder %v1247, 8.507059e+37
      %v1249 = vand.u32 %v1052, 2147483648
      %v1250 = vor.u32 1.1754944e-38, %v1249
      %v1251 = vsel %vm1248, %v1250, %v1246
      %v1252 = vmul.f32 1.0, %v1251
      %v1253 = vrcp.pop %v1053
      %v1254 = vmul.f32 %v1053, %v1253
      %v1255 = vsub.f32 1.0, %v1254
      %v1256 = vmul.f32 %v1253, %v1255
      %v1257 = vadd.f32 %v1253, %v1256
      %vm1258 = vweird.f32 %v1053
      %vm1259 = vweird.f32 %v1253
      %vm1260 = vmor %vm1258, %vm1259
      %v1261 = vsel %vm1260, %v1253, %v1257
      %v1262 = vand.u32 2147483647, %v1053
      %vm1263 = vcmp.eq.f32.partialorder %v1262, 8.507059e+37
      %v1264 = vand.u32 %v1053, 2147483648
      %v1265 = vor.u32 1.1754944e-38, %v1264
      %v1266 = vsel %vm1263, %v1265, %v1261
      %v1267 = vmul.f32 1.0, %v1266
      %v1268 = vrcp.pop %v1054
      %v1269 = vmul.f32 %v1054, %v1268
      %v1270 = vsub.f32 1.0, %v1269
      %v1271 = vmul.f32 %v1268, %v1270
      %v1272 = vadd.f32 %v1268, %v1271
      %vm1273 = vweird.f32 %v1054
      %vm1274 = vweird.f32 %v1268
      %vm1275 = vmor %vm1273, %vm1274
      %v1276 = vsel %vm1275, %v1268, %v1272
      %v1277 = vand.u32 2147483647, %v1054
      %vm1278 = vcmp.eq.f32.partialorder %v1277, 8.507059e+37
      %v1279 = vand.u32 %v1054, 2147483648
      %v1280 = vor.u32 1.1754944e-38, %v1279
      %v1281 = vsel %vm1278, %v1280, %v1276
      %v1282 = vmul.f32 1.0, %v1281
      %v1283 = vrcp.pop %v1055
      %v1284 = vmul.f32 %v1055, %v1283
      %v1285 = vsub.f32 1.0, %v1284
      %v1286 = vmul.f32 %v1283, %v1285
      %v1287 = vadd.f32 %v1283, %v1286
      %vm1288 = vweird.f32 %v1055
      %vm1289 = vweird.f32 %v1283
      %vm1290 = vmor %vm1288, %vm1289
      %v1291 = vsel %vm1290, %v1283, %v1287
      %v1292 = vand.u32 2147483647, %v1055
      %vm1293 = vcmp.eq.f32.partialorder %v1292, 8.507059e+37
      %v1294 = vand.u32 %v1055, 2147483648
      %v1295 = vor.u32 1.1754944e-38, %v1294
      %v1296 = vsel %vm1293, %v1295, %v1291
      %v1297 = vmul.f32 1.0, %v1296
      %v1298 = vrcp.pop %v1056
      %v1299 = vmul.f32 %v1056, %v1298
      %v1300 = vsub.f32 1.0, %v1299
      %v1301 = vmul.f32 %v1298, %v1300
      %v1302 = vadd.f32 %v1298, %v1301
      %vm1303 = vweird.f32 %v1056
      %vm1304 = vweird.f32 %v1298
      %vm1305 = vmor %vm1303, %vm1304
      %v1306 = vsel %vm1305, %v1298, %v1302
      %v1307 = vand.u32 2147483647, %v1056
      %vm1308 = vcmp.eq.f32.partialorder %v1307, 8.507059e+37
      %v1309 = vand.u32 %v1056, 2147483648
      %v1310 = vor.u32 1.1754944e-38, %v1309
      %v1311 = vsel %vm1308, %v1310, %v1306
      %v1312 = vmul.f32 1.0, %v1311
      %v1313 = vrcp.pop %v1057
      %v1314 = vmul.f32 %v1057, %v1313
      %v1315 = vsub.f32 1.0, %v1314
      %v1316 = vmul.f32 %v1313, %v1315
      %v1317 = vadd.f32 %v1313, %v1316
      %vm1318 = vweird.f32 %v1057
      %vm1319 = vweird.f32 %v1313
      %vm1320 = vmor %vm1318, %vm1319
      %v1321 = vsel %vm1320, %v1313, %v1317
      %v1322 = vand.u32 2147483647, %v1057
      %vm1323 = vcmp.eq.f32.partialorder %v1322, 8.507059e+37
      %v1324 = vand.u32 %v1057, 2147483648
      %v1325 = vor.u32 1.1754944e-38, %v1324
      %v1326 = vsel %vm1323, %v1325, %v1321
      %v1327 = vmul.f32 1.0, %v1326
      %v1328 = vrcp.pop %v1058
      %v1329 = vmul.f32 %v1058, %v1328
      %v1330 = vsub.f32 1.0, %v1329
      %v1331 = vmul.f32 %v1328, %v1330
      %v1332 = vadd.f32 %v1328, %v1331
      %vm1333 = vweird.f32 %v1058
      %vm1334 = vweird.f32 %v1328
      %vm1335 = vmor %vm1333, %vm1334
      %v1336 = vsel %vm1335, %v1328, %v1332
      %v1337 = vand.u32 2147483647, %v1058
      %vm1338 = vcmp.eq.f32.partialorder %v1337, 8.507059e+37
      %v1339 = vand.u32 %v1058, 2147483648
      %v1340 = vor.u32 1.1754944e-38, %v1339
      %v1341 = vsel %vm1338, %v1340, %v1336
      %v1342 = vmul.f32 1.0, %v1341
      %v1343 = vrcp.pop %v1059
      %v1344 = vmul.f32 %v1059, %v1343
      %v1345 = vsub.f32 1.0, %v1344
      %v1346 = vmul.f32 %v1343, %v1345
      %v1347 = vadd.f32 %v1343, %v1346
      %vm1348 = vweird.f32 %v1059
      %vm1349 = vweird.f32 %v1343
      %vm1350 = vmor %vm1348, %vm1349
      %v1351 = vsel %vm1350, %v1343, %v1347
      %v1352 = vand.u32 2147483647, %v1059
      %vm1353 = vcmp.eq.f32.partialorder %v1352, 8.507059e+37
      %v1354 = vand.u32 %v1059, 2147483648
      %v1355 = vor.u32 1.1754944e-38, %v1354
      %v1356 = vsel %vm1353, %v1355, %v1351
      %v1357 = vmul.f32 1.0, %v1356
      %v1358 = vrcp.pop %v1060
      %v1359 = vmul.f32 %v1060, %v1358
      %v1360 = vsub.f32 1.0, %v1359
      %v1361 = vmul.f32 %v1358, %v1360
      %v1362 = vadd.f32 %v1358, %v1361
      %vm1363 = vweird.f32 %v1060
      %vm1364 = vweird.f32 %v1358
      %vm1365 = vmor %vm1363, %vm1364
      %v1366 = vsel %vm1365, %v1358, %v1362
      %v1367 = vand.u32 2147483647, %v1060
      %vm1368 = vcmp.eq.f32.partialorder %v1367, 8.507059e+37
      %v1369 = vand.u32 %v1060, 2147483648
      %v1370 = vor.u32 1.1754944e-38, %v1369
      %v1371 = vsel %vm1368, %v1370, %v1366
      %v1372 = vmul.f32 1.0, %v1371
      %v1373 = vrcp.pop %v1061
      %v1374 = vmul.f32 %v1061, %v1373
      %v1375 = vsub.f32 1.0, %v1374
      %v1376 = vmul.f32 %v1373, %v1375
      %v1377 = vadd.f32 %v1373, %v1376
      %vm1378 = vweird.f32 %v1061
      %vm1379 = vweird.f32 %v1373
      %vm1380 = vmor %vm1378, %vm1379
      %v1381 = vsel %vm1380, %v1373, %v1377
      %v1382 = vand.u32 2147483647, %v1061
      %vm1383 = vcmp.eq.f32.partialorder %v1382, 8.507059e+37
      %v1384 = vand.u32 %v1061, 2147483648
      %v1385 = vor.u32 1.1754944e-38, %v1384
      %v1386 = vsel %vm1383, %v1385, %v1381
      %v1387 = vmul.f32 1.0, %v1386
      %v1388 = vrcp.pop %v1062
      %v1389 = vmul.f32 %v1062, %v1388
      %v1390 = vsub.f32 1.0, %v1389
      %v1391 = vmul.f32 %v1388, %v1390
      %v1392 = vadd.f32 %v1388, %v1391
      %vm1393 = vweird.f32 %v1062
      %vm1394 = vweird.f32 %v1388
      %vm1395 = vmor %vm1393, %vm1394
      %v1396 = vsel %vm1395, %v1388, %v1392
      %v1397 = vand.u32 2147483647, %v1062
      %vm1398 = vcmp.eq.f32.partialorder %v1397, 8.507059e+37
      %v1399 = vand.u32 %v1062, 2147483648
      %v1400 = vor.u32 1.1754944e-38, %v1399
      %v1401 = vsel %vm1398, %v1400, %v1396
      %v1402 = vmul.f32 1.0, %v1401
      %v1403 = vrcp.pop %v1063
      %v1404 = vmul.f32 %v1063, %v1403
      %v1405 = vsub.f32 1.0, %v1404
      %v1406 = vmul.f32 %v1403, %v1405
      %v1407 = vadd.f32 %v1403, %v1406
      %vm1408 = vweird.f32 %v1063
      %vm1409 = vweird.f32 %v1403
      %vm1410 = vmor %vm1408, %vm1409
      %v1411 = vsel %vm1410, %v1403, %v1407
      %v1412 = vand.u32 2147483647, %v1063
      %vm1413 = vcmp.eq.f32.partialorder %v1412, 8.507059e+37
      %v1414 = vand.u32 %v1063, 2147483648
      %v1415 = vor.u32 1.1754944e-38, %v1414
      %v1416 = vsel %vm1413, %v1415, %v1411
      %v1417 = vmul.f32 1.0, %v1416
      %v1418 = vrcp.pop %v1064
      %v1419 = vmul.f32 %v1064, %v1418
      %v1420 = vsub.f32 1.0, %v1419
      %v1421 = vmul.f32 %v1418, %v1420
      %v1422 = vadd.f32 %v1418, %v1421
      %vm1423 = vweird.f32 %v1064
      %vm1424 = vweird.f32 %v1418
      %vm1425 = vmor %vm1423, %vm1424
      %v1426 = vsel %vm1425, %v1418, %v1422
      %v1427 = vand.u32 2147483647, %v1064
      %vm1428 = vcmp.eq.f32.partialorder %v1427, 8.507059e+37
      %v1429 = vand.u32 %v1064, 2147483648
      %v1430 = vor.u32 1.1754944e-38, %v1429
      %v1431 = vsel %vm1428, %v1430, %v1426
      %v1432 = vmul.f32 1.0, %v1431
      %v1433 = vrcp.pop %v1065
      %v1434 = vmul.f32 %v1065, %v1433
      %v1435 = vsub.f32 1.0, %v1434
      %v1436 = vmul.f32 %v1433, %v1435
      %v1437 = vadd.f32 %v1433, %v1436
      %vm1438 = vweird.f32 %v1065
      %vm1439 = vweird.f32 %v1433
      %vm1440 = vmor %vm1438, %vm1439
      %v1441 = vsel %vm1440, %v1433, %v1437
      %v1442 = vand.u32 2147483647, %v1065
      %vm1443 = vcmp.eq.f32.partialorder %v1442, 8.507059e+37
      %v1444 = vand.u32 %v1065, 2147483648
      %v1445 = vor.u32 1.1754944e-38, %v1444
      %v1446 = vsel %vm1443, %v1445, %v1441
      %v1447 = vmul.f32 1.0, %v1446
      %v1448 = vrcp.pop %v1066
      %v1449 = vmul.f32 %v1066, %v1448
      %v1450 = vsub.f32 1.0, %v1449
      %v1451 = vmul.f32 %v1448, %v1450
      %v1452 = vadd.f32 %v1448, %v1451
      %vm1453 = vweird.f32 %v1066
      %vm1454 = vweird.f32 %v1448
      %vm1455 = vmor %vm1453, %vm1454
      %v1456 = vsel %vm1455, %v1448, %v1452
      %v1457 = vand.u32 2147483647, %v1066
      %vm1458 = vcmp.eq.f32.partialorder %v1457, 8.507059e+37
      %v1459 = vand.u32 %v1066, 2147483648
      %v1460 = vor.u32 1.1754944e-38, %v1459
      %v1461 = vsel %vm1458, %v1460, %v1456
      %v1462 = vmul.f32 1.0, %v1461
      %v1463 = vrcp.pop %v1067
      %v1464 = vmul.f32 %v1067, %v1463
      %v1465 = vsub.f32 1.0, %v1464
      %v1466 = vmul.f32 %v1463, %v1465
      %v1467 = vadd.f32 %v1463, %v1466
      %vm1468 = vweird.f32 %v1067
      %vm1469 = vweird.f32 %v1463
      %vm1470 = vmor %vm1468, %vm1469
      %v1471 = vsel %vm1470, %v1463, %v1467
      %v1472 = vand.u32 2147483647, %v1067
      %vm1473 = vcmp.eq.f32.partialorder %v1472, 8.507059e+37
      %v1474 = vand.u32 %v1067, 2147483648
      %v1475 = vor.u32 1.1754944e-38, %v1474
      %v1476 = vsel %vm1473, %v1475, %v1471
      %v1477 = vmul.f32 1.0, %v1476
      %v1478 = vrcp.pop %v1068
      %v1479 = vmul.f32 %v1068, %v1478
      %v1480 = vsub.f32 1.0, %v1479
      %v1481 = vmul.f32 %v1478, %v1480
      %v1482 = vadd.f32 %v1478, %v1481
      %vm1483 = vweird.f32 %v1068
      %vm1484 = vweird.f32 %v1478
      %vm1485 = vmor %vm1483, %vm1484
      %v1486 = vsel %vm1485, %v1478, %v1482
      %v1487 = vand.u32 2147483647, %v1068
      %vm1488 = vcmp.eq.f32.partialorder %v1487, 8.507059e+37
      %v1489 = vand.u32 %v1068, 2147483648
      %v1490 = vor.u32 1.1754944e-38, %v1489
      %v1491 = vsel %vm1488, %v1490, %v1486
      %v1492 = vmul.f32 1.0, %v1491
      %v1493 = vrcp.pop %v1069
      %v1494 = vmul.f32 %v1069, %v1493
      %v1495 = vsub.f32 1.0, %v1494
      %v1496 = vmul.f32 %v1493, %v1495
      %v1497 = vadd.f32 %v1493, %v1496
      %vm1498 = vweird.f32 %v1069
      %vm1499 = vweird.f32 %v1493
      %vm1500 = vmor %vm1498, %vm1499
      %v1501 = vsel %vm1500, %v1493, %v1497
      %v1502 = vand.u32 2147483647, %v1069
      %vm1503 = vcmp.eq.f32.partialorder %v1502, 8.507059e+37
      %v1504 = vand.u32 %v1069, 2147483648
      %v1505 = vor.u32 1.1754944e-38, %v1504
      %v1506 = vsel %vm1503, %v1505, %v1501
      %v1507 = vmul.f32 1.0, %v1506
      %v1508 = vrcp.pop %v1070
      %v1509 = vmul.f32 %v1070, %v1508
      %v1510 = vsub.f32 1.0, %v1509
      %v1511 = vmul.f32 %v1508, %v1510
      %v1512 = vadd.f32 %v1508, %v1511
      %vm1513 = vweird.f32 %v1070
      %vm1514 = vweird.f32 %v1508
      %vm1515 = vmor %vm1513, %vm1514
      %v1516 = vsel %vm1515, %v1508, %v1512
      %v1517 = vand.u32 2147483647, %v1070
      %vm1518 = vcmp.eq.f32.partialorder %v1517, 8.507059e+37
      %v1519 = vand.u32 %v1070, 2147483648
      %v1520 = vor.u32 1.1754944e-38, %v1519
      %v1521 = vsel %vm1518, %v1520, %v1516
      %v1522 = vmul.f32 1.0, %v1521
      %v1523 = vrcp.pop %v1071
      %v1524 = vmul.f32 %v1071, %v1523
      %v1525 = vsub.f32 1.0, %v1524
      %v1526 = vmul.f32 %v1523, %v1525
      %v1527 = vadd.f32 %v1523, %v1526
      %vm1528 = vweird.f32 %v1071
      %vm1529 = vweird.f32 %v1523
      %vm1530 = vmor %vm1528, %vm1529
      %v1531 = vsel %vm1530, %v1523, %v1527
      %v1532 = vand.u32 2147483647, %v1071
      %vm1533 = vcmp.eq.f32.partialorder %v1532, 8.507059e+37
      %v1534 = vand.u32 %v1071, 2147483648
      %v1535 = vor.u32 1.1754944e-38, %v1534
      %v1536 = vsel %vm1533, %v1535, %v1531
      %v1537 = vmul.f32 1.0, %v1536
      %v1538 = vrcp.pop %v1072
      %v1539 = vmul.f32 %v1072, %v1538
      %v1540 = vsub.f32 1.0, %v1539
      %v1541 = vmul.f32 %v1538, %v1540
      %v1542 = vadd.f32 %v1538, %v1541
      %vm1543 = vweird.f32 %v1072
      %vm1544 = vweird.f32 %v1538
      %vm1545 = vmor %vm1543, %vm1544
      %v1546 = vsel %vm1545, %v1538, %v1542
      %v1547 = vand.u32 2147483647, %v1072
      %vm1548 = vcmp.eq.f32.partialorder %v1547, 8.507059e+37
      %v1549 = vand.u32 %v1072, 2147483648
      %v1550 = vor.u32 1.1754944e-38, %v1549
      %v1551 = vsel %vm1548, %v1550, %v1546
      %v1552 = vmul.f32 1.0, %v1551
      %v1553 = vpack.c.bf16 %v1117, %v1087
      %v1554 = vpack.c.bf16 %v1132, %v1102
      %v1555 = vpack.c.bf16 %v1177, %v1147
      %v1556 = vpack.c.bf16 %v1192, %v1162
      %v1557 = vpack.c.bf16 %v1237, %v1207
      %v1558 = vpack.c.bf16 %v1252, %v1222
      %v1559 = vpack.c.bf16 %v1297, %v1267
      %v1560 = vpack.c.bf16 %v1312, %v1282
      %v1561 = vpack.c.bf16 %v1357, %v1327
      %v1562 = vpack.c.bf16 %v1372, %v1342
      %v1563 = vpack.c.bf16 %v1417, %v1387
      %v1564 = vpack.c.bf16 %v1432, %v1402
      %v1565 = vpack.c.bf16 %v1477, %v1447
      %v1566 = vpack.c.bf16 %v1492, %v1462
      %v1567 = vpack.c.bf16 %v1537, %v1507
      %v1568 = vpack.c.bf16 %v1552, %v1522
      %v1569 = vld [vmem:[%s5] sm:$0xf]
      %v1570 = vld [vmem:[%s5 + $0x4] sm:$0xf]
      %v1571 = vld [vmem:[%s5 + $0x8] sm:$0xf]
      %v1572 = vld [vmem:[%s5 + $0xc] sm:$0xf]
      %v1573 = vld [vmem:[%s5 + $0x10] sm:$0xf]
      %v1574 = vld [vmem:[%s5 + $0x14] sm:$0xf]
      %v1575 = vld [vmem:[%s5 + $0x18] sm:$0xf]
      %v1576 = vld [vmem:[%s5 + $0x1c] sm:$0xf]
      %v1577 = vld [vmem:[%s5 + $0x20] sm:$0xf]
      %v1578 = vld [vmem:[%s5 + $0x24] sm:$0xf]
      %v1579 = vld [vmem:[%s5 + $0x28] sm:$0xf]
      %v1580 = vld [vmem:[%s5 + $0x2c] sm:$0xf]
      %v1581 = vld [vmem:[%s5 + $0x30] sm:$0xf]
      %v1582 = vld [vmem:[%s5 + $0x34] sm:$0xf]
      %v1583 = vld [vmem:[%s5 + $0x38] sm:$0xf]
      %v1584 = vld [vmem:[%s5 + $0x3c] sm:$0xf]
      %v1585 = vld [vmem:[%s5 + $0x40] sm:$0xf]
      %v1586 = vld [vmem:[%s5 + $0x44] sm:$0xf]
      %v1587 = vld [vmem:[%s5 + $0x48] sm:$0xf]
      %v1588 = vld [vmem:[%s5 + $0x4c] sm:$0xf]
      %v1589 = vld [vmem:[%s5 + $0x50] sm:$0xf]
      %v1590 = vld [vmem:[%s5 + $0x54] sm:$0xf]
      %v1591 = vld [vmem:[%s5 + $0x58] sm:$0xf]
      %v1592 = vld [vmem:[%s5 + $0x5c] sm:$0xf]
      %v1593 = vld [vmem:[%s5 + $0x60] sm:$0xf]
      %v1594 = vld [vmem:[%s5 + $0x64] sm:$0xf]
      %v1595 = vld [vmem:[%s5 + $0x68] sm:$0xf]
      %v1596 = vld [vmem:[%s5 + $0x6c] sm:$0xf]
      %v1597 = vld [vmem:[%s5 + $0x70] sm:$0xf]
      %v1598 = vld [vmem:[%s5 + $0x74] sm:$0xf]
      %v1599 = vld [vmem:[%s5 + $0x78] sm:$0xf]
      %v1600 = vld [vmem:[%s5 + $0x7c] sm:$0xf]
      %v1601 = vld [vmem:[%s6] sm:$0x1]
      %v1603 = vperm.slane %v1601, 0
      %v1637 = vunpack.c.l.b16 %v1569
      %v1638 = vunpack.c.l.b16 %v1570
      %v1639 = vunpack.c.l.b16 %v1571
      %v1640 = vunpack.c.l.b16 %v1572
      %v1641 = vunpack.c.l.b16 %v1573
      %v1642 = vunpack.c.l.b16 %v1574
      %v1643 = vunpack.c.l.b16 %v1575
      %v1644 = vunpack.c.l.b16 %v1576
      %v1645 = vunpack.c.l.b16 %v1577
      %v1646 = vunpack.c.l.b16 %v1578
      %v1647 = vunpack.c.l.b16 %v1579
      %v1648 = vunpack.c.l.b16 %v1580
      %v1649 = vunpack.c.l.b16 %v1581
      %v1650 = vunpack.c.l.b16 %v1582
      %v1651 = vunpack.c.l.b16 %v1583
      %v1652 = vunpack.c.l.b16 %v1584
      %v1653 = vunpack.c.l.b16 %v1585
      %v1654 = vunpack.c.l.b16 %v1586
      %v1655 = vunpack.c.l.b16 %v1587
      %v1656 = vunpack.c.l.b16 %v1588
      %v1657 = vunpack.c.l.b16 %v1589
      %v1658 = vunpack.c.l.b16 %v1590
      %v1659 = vunpack.c.l.b16 %v1591
      %v1660 = vunpack.c.l.b16 %v1592
      %v1661 = vunpack.c.l.b16 %v1593
      %v1662 = vunpack.c.l.b16 %v1594
      %v1663 = vunpack.c.l.b16 %v1595
      %v1664 = vunpack.c.l.b16 %v1596
      %v1665 = vunpack.c.l.b16 %v1597
      %v1666 = vunpack.c.l.b16 %v1598
      %v1667 = vunpack.c.l.b16 %v1599
      %v1668 = vunpack.c.l.b16 %v1600
      %v1669 = vpack.c.b16 %v1638, %v1637
      %v1670 = vpack.c.b16 %v1640, %v1639
      %v1671 = vpack.c.b16 %v1642, %v1641
      %v1672 = vpack.c.b16 %v1644, %v1643
      %v1673 = vpack.c.b16 %v1646, %v1645
      %v1674 = vpack.c.b16 %v1648, %v1647
      %v1675 = vpack.c.b16 %v1650, %v1649
      %v1676 = vpack.c.b16 %v1652, %v1651
      %v1677 = vpack.c.b16 %v1654, %v1653
      %v1678 = vpack.c.b16 %v1656, %v1655
      %v1679 = vpack.c.b16 %v1658, %v1657
      %v1680 = vpack.c.b16 %v1660, %v1659
      %v1681 = vpack.c.b16 %v1662, %v1661
      %v1682 = vpack.c.b16 %v1664, %v1663
      %v1683 = vpack.c.b16 %v1666, %v1665
      %v1684 = vpack.c.b16 %v1668, %v1667
      %1701 = vmatpush.bf16.msra.mxu0 %v1676
      %1702 = vmatpush.bf16.msra.mxu0 %v1675
      %1703 = vmatpush.bf16.msra.mxu0 %v1674
      %1704 = vmatpush.bf16.msra.mxu0 %v1673
      %1705 = vmatpush.bf16.msra.mxu0 %v1672
      %1706 = vmatpush.bf16.msra.mxu0 %v1671
      %1707 = vmatpush.bf16.msra.mxu0 %v1670
      %1708 = vmatpush.bf16.msra.mxu0 %v1669
      %1709 = vmatmul.bf16.gmra.mxu0 %v1553
      %v1710 = vpop.f32.mrf.mxu0
      %v1711 = vadd.f32 %v1603, %v1710
      %v1712 = vpop.f32.mrf.mxu0
      %v1713 = vadd.f32 %v1603, %v1712
      %1714 = vmatmul.bf16.gmra.mxu0 %v1555
      %v1715 = vpop.f32.mrf.mxu0
      %v1716 = vadd.f32 %v1603, %v1715
      %v1717 = vpop.f32.mrf.mxu0
      %v1718 = vadd.f32 %v1603, %v1717
      %1719 = vmatmul.bf16.gmra.mxu0 %v1557
      %v1720 = vpop.f32.mrf.mxu0
      %v1721 = vadd.f32 %v1603, %v1720
      %v1722 = vpop.f32.mrf.mxu0
      %v1723 = vadd.f32 %v1603, %v1722
      %1724 = vmatmul.bf16.gmra.mxu0 %v1559
      %v1725 = vpop.f32.mrf.mxu0
      %v1726 = vadd.f32 %v1603, %v1725
      %v1727 = vpop.f32.mrf.mxu0
      %v1728 = vadd.f32 %v1603, %v1727
      %1729 = vmatmul.bf16.gmra.mxu0 %v1561
      %v1730 = vpop.f32.mrf.mxu0
      %v1731 = vadd.f32 %v1603, %v1730
      %v1732 = vpop.f32.mrf.mxu0
      %v1733 = vadd.f32 %v1603, %v1732
      %1734 = vmatmul.bf16.gmra.mxu0 %v1563
      %v1735 = vpop.f32.mrf.mxu0
      %v1736 = vadd.f32 %v1603, %v1735
      %v1737 = vpop.f32.mrf.mxu0
      %v1738 = vadd.f32 %v1603, %v1737
      %1739 = vmatmul.bf16.gmra.mxu0 %v1565
      %v1740 = vpop.f32.mrf.mxu0
      %v1741 = vadd.f32 %v1603, %v1740
      %v1742 = vpop.f32.mrf.mxu0
      %v1743 = vadd.f32 %v1603, %v1742
      %1744 = vmatmul.bf16.gmra.mxu0 %v1567
      %v1745 = vpop.f32.mrf.mxu0
      %v1746 = vadd.f32 %v1603, %v1745
      %v1747 = vpop.f32.mrf.mxu0
      %v1748 = vadd.f32 %v1603, %v1747
      %1749 = vdwg.mxu0
      %1750 = vmatpush.bf16.msra.mxu0 %v1684
      %1751 = vmatpush.bf16.msra.mxu0 %v1683
      %1752 = vmatpush.bf16.msra.mxu0 %v1682
      %1753 = vmatpush.bf16.msra.mxu0 %v1681
      %1754 = vmatpush.bf16.msra.mxu0 %v1680
      %1755 = vmatpush.bf16.msra.mxu0 %v1679
      %1756 = vmatpush.bf16.msra.mxu0 %v1678
      %1757 = vmatpush.bf16.msra.mxu0 %v1677
      %1758 = vmatmul.bf16.gmra.mxu0 %v1554
      %v1759 = vpop.f32.mrf.mxu0
      %v1760 = vadd.f32 %v1711, %v1759
      %v1761 = vpop.f32.mrf.mxu0
      %v1762 = vadd.f32 %v1713, %v1761
      %1763 = vmatmul.bf16.gmra.mxu0 %v1556
      %v1764 = vpop.f32.mrf.mxu0
      %v1765 = vadd.f32 %v1716, %v1764
      %v1766 = vpop.f32.mrf.mxu0
      %v1767 = vadd.f32 %v1718, %v1766
      %1768 = vmatmul.bf16.gmra.mxu0 %v1558
      %v1769 = vpop.f32.mrf.mxu0
      %v1770 = vadd.f32 %v1721, %v1769
      %v1771 = vpop.f32.mrf.mxu0
      %v1772 = vadd.f32 %v1723, %v1771
      %1773 = vmatmul.bf16.gmra.mxu0 %v1560
      %v1774 = vpop.f32.mrf.mxu0
      %v1775 = vadd.f32 %v1726, %v1774
      %v1776 = vpop.f32.mrf.mxu0
      %v1777 = vadd.f32 %v1728, %v1776
      %1778 = vmatmul.bf16.gmra.mxu0 %v1562
      %v1779 = vpop.f32.mrf.mxu0
      %v1780 = vadd.f32 %v1731, %v1779
      %v1781 = vpop.f32.mrf.mxu0
      %v1782 = vadd.f32 %v1733, %v1781
      %1783 = vmatmul.bf16.gmra.mxu0 %v1564
      %v1784 = vpop.f32.mrf.mxu0
      %v1785 = vadd.f32 %v1736, %v1784
      %v1786 = vpop.f32.mrf.mxu0
      %v1787 = vadd.f32 %v1738, %v1786
      %1788 = vmatmul.bf16.gmra.mxu0 %v1566
      %v1789 = vpop.f32.mrf.mxu0
      %v1790 = vadd.f32 %v1741, %v1789
      %v1791 = vpop.f32.mrf.mxu0
      %v1792 = vadd.f32 %v1743, %v1791
      %1793 = vmatmul.bf16.gmra.mxu0 %v1568
      %v1794 = vpop.f32.mrf.mxu0
      %v1795 = vadd.f32 %v1746, %v1794
      %v1796 = vpop.f32.mrf.mxu0
      %v1797 = vadd.f32 %v1748, %v1796
      %1798 = vdwg.mxu0
      %1799 = vst [vmem:[%s280] sm:$0xff] %v1760
      %1800 = vst [vmem:[%s280 + $0x8] sm:$0xff] %v1762
      %1801 = vst [vmem:[%s280 + $0x10] sm:$0xff] %v1765
      %1802 = vst [vmem:[%s280 + $0x18] sm:$0xff] %v1767
      %1803 = vst [vmem:[%s280 + $0x20] sm:$0xff] %v1770
      %1804 = vst [vmem:[%s280 + $0x28] sm:$0xff] %v1772
      %1805 = vst [vmem:[%s280 + $0x30] sm:$0xff] %v1775
      %1806 = vst [vmem:[%s280 + $0x38] sm:$0xff] %v1777
      %1807 = vst [vmem:[%s280 + $0x40] sm:$0xff] %v1780
      %1808 = vst [vmem:[%s280 + $0x48] sm:$0xff] %v1782
      %1809 = vst [vmem:[%s280 + $0x50] sm:$0xff] %v1785
      %1810 = vst [vmem:[%s280 + $0x58] sm:$0xff] %v1787
      %1811 = vst [vmem:[%s280 + $0x60] sm:$0xff] %v1790
      %1812 = vst [vmem:[%s280 + $0x68] sm:$0xff] %v1792
      %1813 = vst [vmem:[%s280 + $0x70] sm:$0xff] %v1795
      %1814 = vst [vmem:[%s280 + $0x78] sm:$0xff] %v1797
      %s1815 = smul.u32 16, %s18
      %p1816 = scmp.lt.s32.totalorder %s1815, 31
      %s1817 = scalar_select %p1816, %s1815, 31
      %s1818 = smul.addr %s1817, 8
      %s1819 = scalar_lea.vmem %s7, %s1818
      // Predicated region
      $region49: #{linear_classifier_forward.1} parent=47 // pred_check
        %p1820 = pneg %p188
      $region50: #{linear_classifier_forward.1} parent=47 // pred_check_branch
        %1822 = sbr.rel (%p1820) target = $region52
      $region51: #{linear_classifier_forward.1} parent=47 // pred_region
        %s1823 = smul.u32 16, %s18
      $region52: #{linear_classifier_forward.1} parent=47 // pred_fallthru
        _
    $region48: #{linear_classifier_forward.1} parent=5 // pred_fallthru
      _
    %p1824 = scmp.le.s32.totalorder 2, %s13
    // Predicated region
    $region53: #{linear_classifier_forward.1} parent=5 // pred_check
      %p1825 = pneg %p1824
    $region54: #{linear_classifier_forward.1} parent=5 // pred_check_branch
      %1827 = sbr.rel (%p1825) target = $region56
    $region55: #{linear_classifier_forward.1} parent=5 // pred_region
      %s1828 = ssub.s32 %s13, 2
      // Predicated region
      $region57: #{linear_classifier_forward.1} parent=55 // pred_check
        %p1829 = pneg %p194
      $region58: #{linear_classifier_forward.1} parent=55 // pred_check_branch
        %1831 = sbr.rel (%p1829) target = $region60
      $region59: #{linear_classifier_forward.1} parent=55 // pred_region
        %s1832 = smul.u32 16, %s19
        %p1833 = scmp.lt.s32.totalorder %s1832, 31
        %s1834 = scalar_select %p1833, %s1832, 31
        %s1835 = smul.addr %s1834, 8
        %s1836 = scalar_lea.vmem %s7, %s1835
      $region60: #{linear_classifier_forward.1} parent=55 // pred_fallthru
        _
    $region56: #{linear_classifier_forward.1} parent=5 // pred_fallthru
      _
  $region6: #{linear_classifier_forward.1} parent=0 // loop_footer
    %s17 = sadd.s32 1, %s13
  $region7: #{linear_classifier_forward.1} parent=0 // loop_footer_branch
    %12 = sbr.rel target = $region3
  $region8: #{linear_classifier_forward.1} parent=0 // loop_exit
    _

</llo_original>
